<compile_context>
chip_gen: v7x
topology: tpu7x:2x2x1
jax: 0.10.0
libtpu: 0.0.40
codegen_flags: <defaults>
</compile_context>

<pallas_src>
import functools

import jax
import jax.numpy as jnp
from jax.experimental import pallas as pl
from jax.experimental.pallas import tpu as pltpu


def _complex_ln_kernel(x_ref, p_ref, y_ref, *, eps, channels):
    x = x_ref[...]                       # (TM, 2C) interleaved [re, im, re, im, ...]

    w    = p_ref[0:1, :]                 # (1, 2C) per-channel weight, duplicated re/im
    b    = p_ref[1:2, :]                 # (1, 2C) complex bias, interleaved re/im
    m_re = p_ref[2:3, :]                 # (1, 2C) 1.0 on real lanes, 0.0 on imag lanes

    inv_c = 1.0 / channels
    sum_all = jnp.sum(x, axis=-1, keepdims=True)            # sum(re) + sum(im)
    sum_re  = jnp.sum(x * m_re, axis=-1, keepdims=True)     # sum(re)
    mean_re = sum_re * inv_c
    mean_im = (sum_all - sum_re) * inv_c
    mean = mean_im + m_re * (mean_re - mean_im)              # (TM, 2C) alternating re/im mean

    d = x - mean
    # torch.std on complex: sqrt( sum |x - mean|^2 / (C - 1) )  (unbiased).
    # On the interleaved layout, sum |x-mean|^2 is the full lane reduction of d*d.
    inv_cm1 = jnp.float32(1.0) / jnp.float32(channels - 1)   # inf/NaN for C == 1, like torch
    var = jnp.sum(d * d, axis=-1, keepdims=True) * inv_cm1
    # approx=False keeps the 1e-5 reference tolerance; the kernel is HBM-bound
    # either way (VPU/XLU/EUP all have >2x slack), so this costs nothing visible.
    inv_std = pl.reciprocal(eps + jnp.sqrt(var), approx=False)

    y_ref[...] = d * inv_std * w + b


_MIN_SPLIT_ROWS = 512                    # never shrink blocks below ~512 rows
_VMEM_BUDGET = 24 * 1024 * 1024          # double-buffered in+out budget (explicit
                                         # vmem_limit_bytes set from actual usage)


def _pick_tile_rows(n_rows, lane_width):
    """Row-tile size: as large as the VMEM budget allows; when splitting, use a
    small EVEN step count (v7x has 2 TCs; v5e/v6e only need 2-4 steps for
    DMA/compute overlap), and never drop below ~512-row blocks."""
    bytes_per_row = 2 * 2 * lane_width * 4          # 2 buffers * (in + out) * f32
    rows_cap = max(8, (_VMEM_BUDGET // bytes_per_row) // 8 * 8)

    steps = pl.cdiv(n_rows, min(n_rows, rows_cap))  # steps forced by VMEM
    if n_rows >= 4 * _MIN_SPLIT_ROWS:
        steps = max(steps, 4)
    elif n_rows >= 2 * _MIN_SPLIT_ROWS:
        steps = max(steps, 2)
    if steps > 1 and steps % 2:
        steps += 1                                  # balanced across v7x's 2 TCs

    tm = pl.cdiv(n_rows, steps)
    if tm < n_rows:
        tm = min(pl.cdiv(tm, 8) * 8, rows_cap)      # sublane granularity, VMEM cap
    return max(1, tm)


def complex_ln_view_as_real(x_ri, weights, bias, eps=1e-8):
    """Primary (fast) entry point.

    x_ri: float32 (..., C, 2) -- torch.view_as_real layout of a complex (..., C)
    activation.  Returns the same layout.  Only one HBM read + one HBM write:
    convert complex<->this layout once at the model boundary, not per layer.
    Fastest when 2*C is a multiple of 128 (lane-dense, unmasked stores).
    """
    lead, C, two = x_ri.shape[:-2], x_ri.shape[-2], x_ri.shape[-1]
    assert two == 2, "expected view_as_real layout (..., C, 2)"
    two_c = 2 * C
    R = 1
    for d in lead:
        R *= d
    # (..., C, 2) -> (R, 2C) is a pure row-major reshape: no data movement.
    x_il = x_ri.reshape(R, two_c)

    # One packed param block: [weight duplicated per re/im lane; bias (already
    # interleaved, torch.view_as_real layout); real-lane mask].
    w_il = jnp.repeat(weights.astype(jnp.float32), 2)           # (2C,)
    b_il = bias.astype(jnp.float32).reshape(two_c)              # (2C,)
    mask = jnp.tile(jnp.array([1.0, 0.0], jnp.float32), C)      # (2C,)
    params = jnp.stack([w_il, b_il, mask], axis=0)              # (3, 2C)

    tm = _pick_tile_rows(R, two_c)
    grid = (pl.cdiv(R, tm),)

    # Explicit scoped-VMEM limit from the actual double-buffered footprint:
    # guards the wide-channel / few-row corner, stays well under v7x's 64 MiB.
    block_bytes = tm * two_c * 4
    footprint = 2 * 2 * block_bytes + 2 * 3 * two_c * 4
    vmem_limit = int(min(max(footprint * 5 // 4 + (1 << 20), 32 << 20), 44 << 20))
    # TODO(synk): for absurdly wide C (> ~100k channels) a second (channel) grid
    # axis with a two-pass reduction would be needed; not implemented.

    kernel = functools.partial(_complex_ln_kernel, eps=eps, channels=C)

    y_il = pl.pallas_call(
        kernel,
        out_shape=jax.ShapeDtypeStruct((R, two_c), jnp.float32),
        grid=grid,
        in_specs=[pl.BlockSpec((tm, two_c), lambda i: (i, 0)),
                  pl.BlockSpec((3, two_c), lambda i: (0, 0))],
        out_specs=pl.BlockSpec((tm, two_c), lambda i: (i, 0)),
        input_output_aliases={0: 0},     # read-then-write same block: alias-safe
        compiler_params=pltpu.CompilerParams(
            dimension_semantics=("parallel",),
            vmem_limit_bytes=vmem_limit),
    )(x_il, params)

    return y_il.reshape(x_ri.shape)


def complex_ln(x, weights, bias, eps=1e-8):
    """Convenience adapter: complex64 (..., C) in / out.

    Adds one complex->f32 and one f32->complex conversion pass (Pallas TPU has
    no complex dtype and XLA has no complex<->real bitcast); a model should use
    complex_ln_view_as_real and keep activations in that layout instead.
    """
    x_ri = jnp.stack([jnp.real(x), jnp.imag(x)], axis=-1).astype(jnp.float32)
    y_ri = complex_ln_view_as_real(x_ri, weights, bias, eps=eps)
    return jax.lax.complex(y_ri[..., 0], y_ri[..., 1])


def complex_ln_ref(x, weights, bias, eps=1e-8):
    """Pure-JAX reference matching torch.std_mean semantics on complex input."""
    mean = jnp.mean(x, axis=-1, keepdims=True)
    d = x - mean
    var = jnp.sum(jnp.real(d) ** 2 + jnp.imag(d) ** 2, axis=-1,
                  keepdims=True) / (x.shape[-1] - 1)
    std = jnp.sqrt(var)
    xn = d / (eps + std)
    b = (bias[:, 0] + 1j * bias[:, 1]).astype(jnp.complex64)
    return xn * weights + b


if __name__ == "__main__":
    key = jax.random.PRNGKey(0)

    def run_case(shape, case_key):
        B, H, W, C = shape
        k1, k2, k3, k4 = jax.random.split(case_key, 4)
        x = (jax.random.normal(k1, (B, H, W, C), jnp.float32)
             + 1j * jax.random.normal(k2, (B, H, W, C), jnp.float32)
             ).astype(jnp.complex64)
        # Module shapes: weights (C,), bias (C, 2).  nn.Module inits ones/zeros;
        # perturb deterministically so both parameters are exercised.
        weights = jnp.ones((C,), jnp.float32) + 0.1 * jax.random.normal(k3, (C,), jnp.float32)
        bias = 0.05 * jax.random.normal(k4, (C, 2), jnp.float32)

        y = jax.block_until_ready(complex_ln(x, weights, bias))
        y_ref = complex_ln_ref(x, weights, bias)
        assert y.shape == x.shape and y.dtype == jnp.complex64
        assert jnp.allclose(y, y_ref, atol=1e-5, rtol=1e-4), f"mismatch vs reference for {shape}"

    k_a, k_b = jax.random.split(key)
    # Lane-dense fast path: C=64 -> 2C=128 (unmasked stores).
    run_case((2, 16, 16, 64), k_a)
    # Non-aligned channel count: C=24 -> 2C=48; checks that padded lanes don't
    # pollute the mean/variance reductions (correctness-review request).
    run_case((2, 8, 16, 24), k_b)

    print("KERNEL_OK")
</pallas_src>

<mosaic_0001>
module attributes {stable_mosaic.version = 11 : i64} {
  func.func @_complex_ln_kernel(%arg0: i32, %arg1: memref<512x128xf32, #tpu.memory_space<vmem>>, %arg2: memref<3x128xf32, #tpu.memory_space<vmem>>, %arg3: memref<512x128xf32, #tpu.memory_space<vmem>>) attributes {dimension_semantics = [#tpu.dimension_semantics<parallel>], iteration_bounds = array<i64: 1>, scalar_prefetch = 0 : i64, scratch_operands = 0 : i64, tpu.core_type = #tpu.core_type<tc>, window_params = [{transform_indices = @transform_0, window_bounds = array<i64: 512, 128>}, {pipeline_mode = #tpu.pipeline_mode<synchronous>, transform_indices = @transform_1, window_bounds = array<i64: 3, 128>}, {transform_indices = @transform_2, window_bounds = array<i64: 512, 128>}]} {
    %c0 = arith.constant 0 : index
    %c0_0 = arith.constant 0 : index
    %0 = vector.load %arg1[%c0, %c0_0] : memref<512x128xf32, #tpu.memory_space<vmem>>, vector<512x128xf32>
    %c0_1 = arith.constant 0 : index
    %c0_2 = arith.constant 0 : index
    %1 = vector.load %arg2[%c0_1, %c0_2] : memref<3x128xf32, #tpu.memory_space<vmem>>, vector<1x128xf32>
    %c1 = arith.constant 1 : index
    %c0_3 = arith.constant 0 : index
    %2 = vector.load %arg2[%c1, %c0_3] : memref<3x128xf32, #tpu.memory_space<vmem>>, vector<1x128xf32>
    %c2 = arith.constant 2 : index
    %c0_4 = arith.constant 0 : index
    %3 = vector.load %arg2[%c2, %c0_4] : memref<3x128xf32, #tpu.memory_space<vmem>>, vector<1x128xf32>
    %cst = arith.constant dense<0.000000e+00> : vector<512xf32>
    %4 = vector.multi_reduction <add>, %0, %cst [1] : vector<512x128xf32> to vector<512xf32>
    %5 = vector.shape_cast %4 : vector<512xf32> to vector<512x1xf32>
    %6 = vector.broadcast %3 : vector<1x128xf32> to vector<512x128xf32>
    %7 = arith.mulf %0, %6 : vector<512x128xf32>
    %cst_5 = arith.constant dense<0.000000e+00> : vector<512xf32>
    %8 = vector.multi_reduction <add>, %7, %cst_5 [1] : vector<512x128xf32> to vector<512xf32>
    %9 = vector.shape_cast %8 : vector<512xf32> to vector<512x1xf32>
    %cst_6 = arith.constant 1.562500e-02 : f32
    %10 = vector.broadcast %cst_6 : f32 to vector<512x1xf32>
    %11 = arith.mulf %9, %10 : vector<512x1xf32>
    %12 = arith.subf %5, %9 : vector<512x1xf32>
    %cst_7 = arith.constant 1.562500e-02 : f32
    %13 = vector.broadcast %cst_7 : f32 to vector<512x1xf32>
    %14 = arith.mulf %12, %13 : vector<512x1xf32>
    %15 = arith.subf %11, %14 : vector<512x1xf32>
    %16 = vector.broadcast %3 : vector<1x128xf32> to vector<512x128xf32>
    %17 = vector.broadcast %15 : vector<512x1xf32> to vector<512x128xf32>
    %18 = arith.mulf %16, %17 : vector<512x128xf32>
    %19 = vector.broadcast %14 : vector<512x1xf32> to vector<512x128xf32>
    %20 = arith.addf %19, %18 : vector<512x128xf32>
    %21 = arith.subf %0, %20 : vector<512x128xf32>
    %cst_8 = arith.constant 1.000000e+00 : f32
    %cst_9 = arith.constant 6.300000e+01 : f32
    %22 = arith.divf %cst_8, %cst_9 : f32
    %23 = arith.mulf %21, %21 : vector<512x128xf32>
    %cst_10 = arith.constant dense<0.000000e+00> : vector<512xf32>
    %24 = vector.multi_reduction <add>, %23, %cst_10 [1] : vector<512x128xf32> to vector<512xf32>
    %25 = vector.shape_cast %24 : vector<512xf32> to vector<512x1xf32>
    %26 = vector.broadcast %22 : f32 to vector<512x1xf32>
    %27 = arith.mulf %25, %26 : vector<512x1xf32>
    %28 = math.sqrt %27 : vector<512x1xf32>
    %cst_11 = arith.constant 9.99999993E-9 : f32
    %29 = vector.broadcast %cst_11 : f32 to vector<512x1xf32>
    %30 = arith.addf %29, %28 : vector<512x1xf32>
    %31 = tpu.reciprocal %30 : vector<512x1xf32> -> vector<512x1xf32>
    %32 = vector.broadcast %31 : vector<512x1xf32> to vector<512x128xf32>
    %33 = arith.mulf %21, %32 : vector<512x128xf32>
    %34 = vector.broadcast %1 : vector<1x128xf32> to vector<512x128xf32>
    %35 = arith.mulf %33, %34 : vector<512x128xf32>
    %36 = vector.broadcast %2 : vector<1x128xf32> to vector<512x128xf32>
    %37 = arith.addf %35, %36 : vector<512x128xf32>
    %c0_12 = arith.constant 0 : index
    %c0_13 = arith.constant 0 : index
    %38 = vector.load %arg3[%c0_12, %c0_13] : memref<512x128xf32, #tpu.memory_space<vmem>>, vector<512x128xf32>
    tpu.vector_store %arg3[%c0_12, %c0_13], %37 {strides = array<i32>} : memref<512x128xf32, #tpu.memory_space<vmem>>, vector<512x128xf32>,
    return
  }
  func.func @transform_0(%arg0: i32) -> (i32, i32) {
    %c0_i32 = arith.constant 0 : i32
    %c0_i32_0 = arith.constant 0 : i32
    return %arg0, %c0_i32 : i32, i32
  }
  func.func @transform_1(%arg0: i32) -> (i32, i32) {
    %c0_i32 = arith.constant 0 : i32
    %c0_i32_0 = arith.constant 0 : i32
    %c0_i32_1 = arith.constant 0 : i32
    return %c0_i32, %c0_i32_0 : i32, i32
  }
  func.func @transform_2(%arg0: i32) -> (i32, i32) {
    %c0_i32 = arith.constant 0 : i32
    %c0_i32_0 = arith.constant 0 : i32
    return %arg0, %c0_i32 : i32, i32
  }
}

</mosaic_0001>

<llo_original>
// kernel: tpu_custom_call.1
$region0: #{tpu_custom_call.1}
  #allocation0 [shape = 'u32[]', space=smem, size = 0x4, offset = 0x4, fixed_abs, tag = 'smem constant byte address 0x4 - core index']
  #allocation1 [shape = 'u32[144,128]{1,0:T(1,128)}', space=vmem, size = 0x12000, scoped, tag = 'internal scratch']
  %s0 = inlined_call_operand.hbm [shape: f32[512,128], index: 0, kind: input, shape index: {}, may-alias: {0,2}]
  %s1 = inlined_call_operand.vmem [shape: f32[3,128], index: 1, kind: input, shape index: {}]
  %s2 = inlined_call_operand.hbm [shape: f32[512,128], index: 2, kind: output, shape index: {}, may-alias: {0,2}]
  %s3 = sld [smem:[#allocation0]]
  $region22: #{tpu_custom_call.1} parent=0
    _
  %s5 = ssub.s32 1, %s3
  %s6 = scalar_select 0, %s5, %s3
  $region1: #{tpu_custom_call.1} parent=0
    #allocation2 [shape = 'u8[262144]{0}', space=vmem, size = 0x40000, scoped, tag = 'input window, operand 0, single buffered']
    #allocation3 [shape = 's32[1]{0}', space=sflag, size = 0x4, scoped, tag = 'scoped memory for tpu_custom_call.1']
    #allocation4 [shape = 's32[1]{0}', space=sflag, size = 0x4, scoped, tag = 'scoped memory for tpu_custom_call.1']
    #allocation5 [shape = 'u8[262144]{0}', space=vmem, size = 0x40000, scoped, tag = 'output window, operand 0, single buffered']
    %7 = vsyncpa [#allocation3], 0
    %8 = vsyncpa [#allocation4], 0
    // Predicated region
    $region2: #{tpu_custom_call.1} parent=1 // pred_check
      _
    $region3: #{tpu_custom_call.1} parent=1 // pred_check_branch
      %10 = sbr.rel (0) target = $region5
    $region4: #{tpu_custom_call.1} parent=1 // pred_region
      %s12 = ssub.s32 8192, 8192
      %13 = vsyncadd [#allocation3], %s12
      %s14 = sshll.u32 [#allocation2], 4
      %s15 = int_to_ptr.vmem [resolvable:$true] %s14
      %20 = dma.hbm_to_vmem [thread:$0]  %s0, 8192, %s15, [#allocation3], 128, 128, 8
    $region5: #{tpu_custom_call.1} parent=1 // pred_fallthru
      _
    // Predicated region
    $region6: #{tpu_custom_call.1} parent=1 // pred_check
      _
    $region7: #{tpu_custom_call.1} parent=1 // pred_check_branch
      %22 = sbr.rel (0) target = $region9
    $region8: #{tpu_custom_call.1} parent=1 // pred_region
      _
    $region9: #{tpu_custom_call.1} parent=1 // pred_fallthru
      _
    // Predicated region
    $region10: #{tpu_custom_call.1} parent=1 // pred_check
      _
    $region11: #{tpu_custom_call.1} parent=1 // pred_check_branch
      %24 = sbr.rel (0) target = $region13
    $region12: #{tpu_custom_call.1} parent=1 // pred_region
      %25 = dma.done [#allocation3], 8192
    $region13: #{tpu_custom_call.1} parent=1 // pred_fallthru
      _
    %v26 = vld [vmem:[#allocation2] sm:$0xff]
    %v27 = vld [vmem:[#allocation2 + $0x8] sm:$0xff]
    %v28 = vld [vmem:[#allocation2 + $0x10] sm:$0xff]
    %v29 = vld [vmem:[#allocation2 + $0x18] sm:$0xff]
    %v30 = vld [vmem:[#allocation2 + $0x20] sm:$0xff]
    %v31 = vld [vmem:[#allocation2 + $0x28] sm:$0xff]
    %v32 = vld [vmem:[#allocation2 + $0x30] sm:$0xff]
    %v33 = vld [vmem:[#allocation2 + $0x38] sm:$0xff]
    %v34 = vld [vmem:[#allocation2 + $0x40] sm:$0xff]
    %v35 = vld [vmem:[#allocation2 + $0x48] sm:$0xff]
    %v36 = vld [vmem:[#allocation2 + $0x50] sm:$0xff]
    %v37 = vld [vmem:[#allocation2 + $0x58] sm:$0xff]
    %v38 = vld [vmem:[#allocation2 + $0x60] sm:$0xff]
    %v39 = vld [vmem:[#allocation2 + $0x68] sm:$0xff]
    %v40 = vld [vmem:[#allocation2 + $0x70] sm:$0xff]
    %v41 = vld [vmem:[#allocation2 + $0x78] sm:$0xff]
    %v42 = vld [vmem:[#allocation2 + $0x80] sm:$0xff]
    %v43 = vld [vmem:[#allocation2 + $0x88] sm:$0xff]
    %v44 = vld [vmem:[#allocation2 + $0x90] sm:$0xff]
    %v45 = vld [vmem:[#allocation2 + $0x98] sm:$0xff]
    %v46 = vld [vmem:[#allocation2 + $0xa0] sm:$0xff]
    %v47 = vld [vmem:[#allocation2 + $0xa8] sm:$0xff]
    %v48 = vld [vmem:[#allocation2 + $0xb0] sm:$0xff]
    %v49 = vld [vmem:[#allocation2 + $0xb8] sm:$0xff]
    %v50 = vld [vmem:[#allocation2 + $0xc0] sm:$0xff]
    %v51 = vld [vmem:[#allocation2 + $0xc8] sm:$0xff]
    %v52 = vld [vmem:[#allocation2 + $0xd0] sm:$0xff]
    %v53 = vld [vmem:[#allocation2 + $0xd8] sm:$0xff]
    %v54 = vld [vmem:[#allocation2 + $0xe0] sm:$0xff]
    %v55 = vld [vmem:[#allocation2 + $0xe8] sm:$0xff]
    %v56 = vld [vmem:[#allocation2 + $0xf0] sm:$0xff]
    %v57 = vld [vmem:[#allocation2 + $0xf8] sm:$0xff]
    %v58 = vld [vmem:[#allocation2 + $0x100] sm:$0xff]
    %v59 = vld [vmem:[#allocation2 + $0x108] sm:$0xff]
    %v60 = vld [vmem:[#allocation2 + $0x110] sm:$0xff]
    %v61 = vld [vmem:[#allocation2 + $0x118] sm:$0xff]
    %v62 = vld [vmem:[#allocation2 + $0x120] sm:$0xff]
    %v63 = vld [vmem:[#allocation2 + $0x128] sm:$0xff]
    %v64 = vld [vmem:[#allocation2 + $0x130] sm:$0xff]
    %v65 = vld [vmem:[#allocation2 + $0x138] sm:$0xff]
    %v66 = vld [vmem:[#allocation2 + $0x140] sm:$0xff]
    %v67 = vld [vmem:[#allocation2 + $0x148] sm:$0xff]
    %v68 = vld [vmem:[#allocation2 + $0x150] sm:$0xff]
    %v69 = vld [vmem:[#allocation2 + $0x158] sm:$0xff]
    %v70 = vld [vmem:[#allocation2 + $0x160] sm:$0xff]
    %v71 = vld [vmem:[#allocation2 + $0x168] sm:$0xff]
    %v72 = vld [vmem:[#allocation2 + $0x170] sm:$0xff]
    %v73 = vld [vmem:[#allocation2 + $0x178] sm:$0xff]
    %v74 = vld [vmem:[#allocation2 + $0x180] sm:$0xff]
    %v75 = vld [vmem:[#allocation2 + $0x188] sm:$0xff]
    %v76 = vld [vmem:[#allocation2 + $0x190] sm:$0xff]
    %v77 = vld [vmem:[#allocation2 + $0x198] sm:$0xff]
    %v78 = vld [vmem:[#allocation2 + $0x1a0] sm:$0xff]
    %v79 = vld [vmem:[#allocation2 + $0x1a8] sm:$0xff]
    %v80 = vld [vmem:[#allocation2 + $0x1b0] sm:$0xff]
    %v81 = vld [vmem:[#allocation2 + $0x1b8] sm:$0xff]
    %v82 = vld [vmem:[#allocation2 + $0x1c0] sm:$0xff]
    %v83 = vld [vmem:[#allocation2 + $0x1c8] sm:$0xff]
    %v84 = vld [vmem:[#allocation2 + $0x1d0] sm:$0xff]
    %v85 = vld [vmem:[#allocation2 + $0x1d8] sm:$0xff]
    %v86 = vld [vmem:[#allocation2 + $0x1e0] sm:$0xff]
    %v87 = vld [vmem:[#allocation2 + $0x1e8] sm:$0xff]
    %v88 = vld [vmem:[#allocation2 + $0x1f0] sm:$0xff]
    %v89 = vld [vmem:[#allocation2 + $0x1f8] sm:$0xff]
    %v90 = vld [vmem:[%s1] sm:$0x1]
    %v91 = vld [vmem:[%s1 + $0x1] sm:$0x1]
    %v92 = vld [vmem:[%s1 + $0x2] sm:$0x1]
    %93 = vadd.xlane.f32.xlu0 %v26
    %v94 = vpop.xlane.xlu0 %93
    %95 = vadd.xlane.f32.xlu0 %v27
    %v96 = vpop.xlane.xlu0 %95
    %97 = vadd.xlane.f32.xlu0 %v28
    %v98 = vpop.xlane.xlu0 %97
    %99 = vadd.xlane.f32.xlu0 %v29
    %v100 = vpop.xlane.xlu0 %99
    %101 = vadd.xlane.f32.xlu0 %v30
    %v102 = vpop.xlane.xlu0 %101
    %103 = vadd.xlane.f32.xlu0 %v31
    %v104 = vpop.xlane.xlu0 %103
    %105 = vadd.xlane.f32.xlu0 %v32
    %v106 = vpop.xlane.xlu0 %105
    %107 = vadd.xlane.f32.xlu0 %v33
    %v108 = vpop.xlane.xlu0 %107
    %109 = vadd.xlane.f32.xlu0 %v34
    %v110 = vpop.xlane.xlu0 %109
    %111 = vadd.xlane.f32.xlu0 %v35
    %v112 = vpop.xlane.xlu0 %111
    %113 = vadd.xlane.f32.xlu0 %v36
    %v114 = vpop.xlane.xlu0 %113
    %115 = vadd.xlane.f32.xlu0 %v37
    %v116 = vpop.xlane.xlu0 %115
    %117 = vadd.xlane.f32.xlu0 %v38
    %v118 = vpop.xlane.xlu0 %117
    %119 = vadd.xlane.f32.xlu0 %v39
    %v120 = vpop.xlane.xlu0 %119
    %121 = vadd.xlane.f32.xlu0 %v40
    %v122 = vpop.xlane.xlu0 %121
    %123 = vadd.xlane.f32.xlu0 %v41
    %v124 = vpop.xlane.xlu0 %123
    %125 = vadd.xlane.f32.xlu0 %v42
    %v126 = vpop.xlane.xlu0 %125
    %127 = vadd.xlane.f32.xlu0 %v43
    %v128 = vpop.xlane.xlu0 %127
    %129 = vadd.xlane.f32.xlu0 %v44
    %v130 = vpop.xlane.xlu0 %129
    %131 = vadd.xlane.f32.xlu0 %v45
    %v132 = vpop.xlane.xlu0 %131
    %133 = vadd.xlane.f32.xlu0 %v46
    %v134 = vpop.xlane.xlu0 %133
    %135 = vadd.xlane.f32.xlu0 %v47
    %v136 = vpop.xlane.xlu0 %135
    %137 = vadd.xlane.f32.xlu0 %v48
    %v138 = vpop.xlane.xlu0 %137
    %139 = vadd.xlane.f32.xlu0 %v49
    %v140 = vpop.xlane.xlu0 %139
    %141 = vadd.xlane.f32.xlu0 %v50
    %v142 = vpop.xlane.xlu0 %141
    %143 = vadd.xlane.f32.xlu0 %v51
    %v144 = vpop.xlane.xlu0 %143
    %145 = vadd.xlane.f32.xlu0 %v52
    %v146 = vpop.xlane.xlu0 %145
    %147 = vadd.xlane.f32.xlu0 %v53
    %v148 = vpop.xlane.xlu0 %147
    %149 = vadd.xlane.f32.xlu0 %v54
    %v150 = vpop.xlane.xlu0 %149
    %151 = vadd.xlane.f32.xlu0 %v55
    %v152 = vpop.xlane.xlu0 %151
    %153 = vadd.xlane.f32.xlu0 %v56
    %v154 = vpop.xlane.xlu0 %153
    %155 = vadd.xlane.f32.xlu0 %v57
    %v156 = vpop.xlane.xlu0 %155
    %157 = vadd.xlane.f32.xlu0 %v58
    %v158 = vpop.xlane.xlu0 %157
    %159 = vadd.xlane.f32.xlu0 %v59
    %v160 = vpop.xlane.xlu0 %159
    %161 = vadd.xlane.f32.xlu0 %v60
    %v162 = vpop.xlane.xlu0 %161
    %163 = vadd.xlane.f32.xlu0 %v61
    %v164 = vpop.xlane.xlu0 %163
    %165 = vadd.xlane.f32.xlu0 %v62
    %v166 = vpop.xlane.xlu0 %165
    %167 = vadd.xlane.f32.xlu0 %v63
    %v168 = vpop.xlane.xlu0 %167
    %169 = vadd.xlane.f32.xlu0 %v64
    %v170 = vpop.xlane.xlu0 %169
    %171 = vadd.xlane.f32.xlu0 %v65
    %v172 = vpop.xlane.xlu0 %171
    %173 = vadd.xlane.f32.xlu0 %v66
    %v174 = vpop.xlane.xlu0 %173
    %175 = vadd.xlane.f32.xlu0 %v67
    %v176 = vpop.xlane.xlu0 %175
    %177 = vadd.xlane.f32.xlu0 %v68
    %v178 = vpop.xlane.xlu0 %177
    %179 = vadd.xlane.f32.xlu0 %v69
    %v180 = vpop.xlane.xlu0 %179
    %181 = vadd.xlane.f32.xlu0 %v70
    %v182 = vpop.xlane.xlu0 %181
    %183 = vadd.xlane.f32.xlu0 %v71
    %v184 = vpop.xlane.xlu0 %183
    %185 = vadd.xlane.f32.xlu0 %v72
    %v186 = vpop.xlane.xlu0 %185
    %187 = vadd.xlane.f32.xlu0 %v73
    %v188 = vpop.xlane.xlu0 %187
    %189 = vadd.xlane.f32.xlu0 %v74
    %v190 = vpop.xlane.xlu0 %189
    %191 = vadd.xlane.f32.xlu0 %v75
    %v192 = vpop.xlane.xlu0 %191
    %193 = vadd.xlane.f32.xlu0 %v76
    %v194 = vpop.xlane.xlu0 %193
    %195 = vadd.xlane.f32.xlu0 %v77
    %v196 = vpop.xlane.xlu0 %195
    %197 = vadd.xlane.f32.xlu0 %v78
    %v198 = vpop.xlane.xlu0 %197
    %199 = vadd.xlane.f32.xlu0 %v79
    %v200 = vpop.xlane.xlu0 %199
    %201 = vadd.xlane.f32.xlu0 %v80
    %v202 = vpop.xlane.xlu0 %201
    %203 = vadd.xlane.f32.xlu0 %v81
    %v204 = vpop.xlane.xlu0 %203
    %205 = vadd.xlane.f32.xlu0 %v82
    %v206 = vpop.xlane.xlu0 %205
    %207 = vadd.xlane.f32.xlu0 %v83
    %v208 = vpop.xlane.xlu0 %207
    %209 = vadd.xlane.f32.xlu0 %v84
    %v210 = vpop.xlane.xlu0 %209
    %211 = vadd.xlane.f32.xlu0 %v85
    %v212 = vpop.xlane.xlu0 %211
    %213 = vadd.xlane.f32.xlu0 %v86
    %v214 = vpop.xlane.xlu0 %213
    %215 = vadd.xlane.f32.xlu0 %v87
    %v216 = vpop.xlane.xlu0 %215
    %217 = vadd.xlane.f32.xlu0 %v88
    %v218 = vpop.xlane.xlu0 %217
    %219 = vadd.xlane.f32.xlu0 %v89
    %v220 = vpop.xlane.xlu0 %219
    %v221 = vlaneseq
    %v222 = vshrl.u32 %v221, 7
    %v223 = vsub.s32 0, %v222
    %v224 = vrot.slane %v92, %v223
    %v225 = vmul.f32 %v26, %v224
    %v226 = vmul.f32 %v27, %v224
    %v227 = vmul.f32 %v28, %v224
    %v228 = vmul.f32 %v29, %v224
    %v229 = vmul.f32 %v30, %v224
    %v230 = vmul.f32 %v31, %v224
    %v231 = vmul.f32 %v32, %v224
    %v232 = vmul.f32 %v33, %v224
    %v233 = vmul.f32 %v34, %v224
    %v234 = vmul.f32 %v35, %v224
    %v235 = vmul.f32 %v36, %v224
    %v236 = vmul.f32 %v37, %v224
    %v237 = vmul.f32 %v38, %v224
    %v238 = vmul.f32 %v39, %v224
    %v239 = vmul.f32 %v40, %v224
    %v240 = vmul.f32 %v41, %v224
    %v241 = vmul.f32 %v42, %v224
    %v242 = vmul.f32 %v43, %v224
    %v243 = vmul.f32 %v44, %v224
    %v244 = vmul.f32 %v45, %v224
    %v245 = vmul.f32 %v46, %v224
    %v246 = vmul.f32 %v47, %v224
    %v247 = vmul.f32 %v48, %v224
    %v248 = vmul.f32 %v49, %v224
    %v249 = vmul.f32 %v50, %v224
    %v250 = vmul.f32 %v51, %v224
    %v251 = vmul.f32 %v52, %v224
    %v252 = vmul.f32 %v53, %v224
    %v253 = vmul.f32 %v54, %v224
    %v254 = vmul.f32 %v55, %v224
    %v255 = vmul.f32 %v56, %v224
    %v256 = vmul.f32 %v57, %v224
    %v257 = vmul.f32 %v58, %v224
    %v258 = vmul.f32 %v59, %v224
    %v259 = vmul.f32 %v60, %v224
    %v260 = vmul.f32 %v61, %v224
    %v261 = vmul.f32 %v62, %v224
    %v262 = vmul.f32 %v63, %v224
    %v263 = vmul.f32 %v64, %v224
    %v264 = vmul.f32 %v65, %v224
    %v265 = vmul.f32 %v66, %v224
    %v266 = vmul.f32 %v67, %v224
    %v267 = vmul.f32 %v68, %v224
    %v268 = vmul.f32 %v69, %v224
    %v269 = vmul.f32 %v70, %v224
    %v270 = vmul.f32 %v71, %v224
    %v271 = vmul.f32 %v72, %v224
    %v272 = vmul.f32 %v73, %v224
    %v273 = vmul.f32 %v74, %v224
    %v274 = vmul.f32 %v75, %v224
    %v275 = vmul.f32 %v76, %v224
    %v276 = vmul.f32 %v77, %v224
    %v277 = vmul.f32 %v78, %v224
    %v278 = vmul.f32 %v79, %v224
    %v279 = vmul.f32 %v80, %v224
    %v280 = vmul.f32 %v81, %v224
    %v281 = vmul.f32 %v82, %v224
    %v282 = vmul.f32 %v83, %v224
    %v283 = vmul.f32 %v84, %v224
    %v284 = vmul.f32 %v85, %v224
    %v285 = vmul.f32 %v86, %v224
    %v286 = vmul.f32 %v87, %v224
    %v287 = vmul.f32 %v88, %v224
    %v288 = vmul.f32 %v89, %v224
    %289 = vadd.xlane.f32.xlu0 %v225
    %v290 = vpop.xlane.xlu0 %289
    %291 = vadd.xlane.f32.xlu0 %v226
    %v292 = vpop.xlane.xlu0 %291
    %293 = vadd.xlane.f32.xlu0 %v227
    %v294 = vpop.xlane.xlu0 %293
    %295 = vadd.xlane.f32.xlu0 %v228
    %v296 = vpop.xlane.xlu0 %295
    %297 = vadd.xlane.f32.xlu0 %v229
    %v298 = vpop.xlane.xlu0 %297
    %299 = vadd.xlane.f32.xlu0 %v230
    %v300 = vpop.xlane.xlu0 %299
    %301 = vadd.xlane.f32.xlu0 %v231
    %v302 = vpop.xlane.xlu0 %301
    %303 = vadd.xlane.f32.xlu0 %v232
    %v304 = vpop.xlane.xlu0 %303
    %305 = vadd.xlane.f32.xlu0 %v233
    %v306 = vpop.xlane.xlu0 %305
    %307 = vadd.xlane.f32.xlu0 %v234
    %v308 = vpop.xlane.xlu0 %307
    %309 = vadd.xlane.f32.xlu0 %v235
    %v310 = vpop.xlane.xlu0 %309
    %311 = vadd.xlane.f32.xlu0 %v236
    %v312 = vpop.xlane.xlu0 %311
    %313 = vadd.xlane.f32.xlu0 %v237
    %v314 = vpop.xlane.xlu0 %313
    %315 = vadd.xlane.f32.xlu0 %v238
    %v316 = vpop.xlane.xlu0 %315
    %317 = vadd.xlane.f32.xlu0 %v239
    %v318 = vpop.xlane.xlu0 %317
    %319 = vadd.xlane.f32.xlu0 %v240
    %v320 = vpop.xlane.xlu0 %319
    %321 = vadd.xlane.f32.xlu0 %v241
    %v322 = vpop.xlane.xlu0 %321
    %323 = vadd.xlane.f32.xlu0 %v242
    %v324 = vpop.xlane.xlu0 %323
    %325 = vadd.xlane.f32.xlu0 %v243
    %v326 = vpop.xlane.xlu0 %325
    %327 = vadd.xlane.f32.xlu0 %v244
    %v328 = vpop.xlane.xlu0 %327
    %329 = vadd.xlane.f32.xlu0 %v245
    %v330 = vpop.xlane.xlu0 %329
    %331 = vadd.xlane.f32.xlu0 %v246
    %v332 = vpop.xlane.xlu0 %331
    %333 = vadd.xlane.f32.xlu0 %v247
    %v334 = vpop.xlane.xlu0 %333
    %335 = vadd.xlane.f32.xlu0 %v248
    %v336 = vpop.xlane.xlu0 %335
    %337 = vadd.xlane.f32.xlu0 %v249
    %v338 = vpop.xlane.xlu0 %337
    %339 = vadd.xlane.f32.xlu0 %v250
    %v340 = vpop.xlane.xlu0 %339
    %341 = vadd.xlane.f32.xlu0 %v251
    %v342 = vpop.xlane.xlu0 %341
    %343 = vadd.xlane.f32.xlu0 %v252
    %v344 = vpop.xlane.xlu0 %343
    %345 = vadd.xlane.f32.xlu0 %v253
    %v346 = vpop.xlane.xlu0 %345
    %347 = vadd.xlane.f32.xlu0 %v254
    %v348 = vpop.xlane.xlu0 %347
    %349 = vadd.xlane.f32.xlu0 %v255
    %v350 = vpop.xlane.xlu0 %349
    %351 = vadd.xlane.f32.xlu0 %v256
    %v352 = vpop.xlane.xlu0 %351
    %353 = vadd.xlane.f32.xlu0 %v257
    %v354 = vpop.xlane.xlu0 %353
    %355 = vadd.xlane.f32.xlu0 %v258
    %v356 = vpop.xlane.xlu0 %355
    %357 = vadd.xlane.f32.xlu0 %v259
    %v358 = vpop.xlane.xlu0 %357
    %359 = vadd.xlane.f32.xlu0 %v260
    %v360 = vpop.xlane.xlu0 %359
    %361 = vadd.xlane.f32.xlu0 %v261
    %v362 = vpop.xlane.xlu0 %361
    %363 = vadd.xlane.f32.xlu0 %v262
    %v364 = vpop.xlane.xlu0 %363
    %365 = vadd.xlane.f32.xlu0 %v263
    %v366 = vpop.xlane.xlu0 %365
    %367 = vadd.xlane.f32.xlu0 %v264
    %v368 = vpop.xlane.xlu0 %367
    %369 = vadd.xlane.f32.xlu0 %v265
    %v370 = vpop.xlane.xlu0 %369
    %371 = vadd.xlane.f32.xlu0 %v266
    %v372 = vpop.xlane.xlu0 %371
    %373 = vadd.xlane.f32.xlu0 %v267
    %v374 = vpop.xlane.xlu0 %373
    %375 = vadd.xlane.f32.xlu0 %v268
    %v376 = vpop.xlane.xlu0 %375
    %377 = vadd.xlane.f32.xlu0 %v269
    %v378 = vpop.xlane.xlu0 %377
    %379 = vadd.xlane.f32.xlu0 %v270
    %v380 = vpop.xlane.xlu0 %379
    %381 = vadd.xlane.f32.xlu0 %v271
    %v382 = vpop.xlane.xlu0 %381
    %383 = vadd.xlane.f32.xlu0 %v272
    %v384 = vpop.xlane.xlu0 %383
    %385 = vadd.xlane.f32.xlu0 %v273
    %v386 = vpop.xlane.xlu0 %385
    %387 = vadd.xlane.f32.xlu0 %v274
    %v388 = vpop.xlane.xlu0 %387
    %389 = vadd.xlane.f32.xlu0 %v275
    %v390 = vpop.xlane.xlu0 %389
    %391 = vadd.xlane.f32.xlu0 %v276
    %v392 = vpop.xlane.xlu0 %391
    %393 = vadd.xlane.f32.xlu0 %v277
    %v394 = vpop.xlane.xlu0 %393
    %395 = vadd.xlane.f32.xlu0 %v278
    %v396 = vpop.xlane.xlu0 %395
    %397 = vadd.xlane.f32.xlu0 %v279
    %v398 = vpop.xlane.xlu0 %397
    %399 = vadd.xlane.f32.xlu0 %v280
    %v400 = vpop.xlane.xlu0 %399
    %401 = vadd.xlane.f32.xlu0 %v281
    %v402 = vpop.xlane.xlu0 %401
    %403 = vadd.xlane.f32.xlu0 %v282
    %v404 = vpop.xlane.xlu0 %403
    %405 = vadd.xlane.f32.xlu0 %v283
    %v406 = vpop.xlane.xlu0 %405
    %407 = vadd.xlane.f32.xlu0 %v284
    %v408 = vpop.xlane.xlu0 %407
    %409 = vadd.xlane.f32.xlu0 %v285
    %v410 = vpop.xlane.xlu0 %409
    %411 = vadd.xlane.f32.xlu0 %v286
    %v412 = vpop.xlane.xlu0 %411
    %413 = vadd.xlane.f32.xlu0 %v287
    %v414 = vpop.xlane.xlu0 %413
    %415 = vadd.xlane.f32.xlu0 %v288
    %v416 = vpop.xlane.xlu0 %415
    %v417 = vmul.f32 %v290, 0.015625
    %v418 = vmul.f32 %v292, 0.015625
    %v419 = vmul.f32 %v294, 0.015625
    %v420 = vmul.f32 %v296, 0.015625
    %v421 = vmul.f32 %v298, 0.015625
    %v422 = vmul.f32 %v300, 0.015625
    %v423 = vmul.f32 %v302, 0.015625
    %v424 = vmul.f32 %v304, 0.015625
    %v425 = vmul.f32 %v306, 0.015625
    %v426 = vmul.f32 %v308, 0.015625
    %v427 = vmul.f32 %v310, 0.015625
    %v428 = vmul.f32 %v312, 0.015625
    %v429 = vmul.f32 %v314, 0.015625
    %v430 = vmul.f32 %v316, 0.015625
    %v431 = vmul.f32 %v318, 0.015625
    %v432 = vmul.f32 %v320, 0.015625
    %v433 = vmul.f32 %v322, 0.015625
    %v434 = vmul.f32 %v324, 0.015625
    %v435 = vmul.f32 %v326, 0.015625
    %v436 = vmul.f32 %v328, 0.015625
    %v437 = vmul.f32 %v330, 0.015625
    %v438 = vmul.f32 %v332, 0.015625
    %v439 = vmul.f32 %v334, 0.015625
    %v440 = vmul.f32 %v336, 0.015625
    %v441 = vmul.f32 %v338, 0.015625
    %v442 = vmul.f32 %v340, 0.015625
    %v443 = vmul.f32 %v342, 0.015625
    %v444 = vmul.f32 %v344, 0.015625
    %v445 = vmul.f32 %v346, 0.015625
    %v446 = vmul.f32 %v348, 0.015625
    %v447 = vmul.f32 %v350, 0.015625
    %v448 = vmul.f32 %v352, 0.015625
    %v449 = vmul.f32 %v354, 0.015625
    %v450 = vmul.f32 %v356, 0.015625
    %v451 = vmul.f32 %v358, 0.015625
    %v452 = vmul.f32 %v360, 0.015625
    %v453 = vmul.f32 %v362, 0.015625
    %v454 = vmul.f32 %v364, 0.015625
    %v455 = vmul.f32 %v366, 0.015625
    %v456 = vmul.f32 %v368, 0.015625
    %v457 = vmul.f32 %v370, 0.015625
    %v458 = vmul.f32 %v372, 0.015625
    %v459 = vmul.f32 %v374, 0.015625
    %v460 = vmul.f32 %v376, 0.015625
    %v461 = vmul.f32 %v378, 0.015625
    %v462 = vmul.f32 %v380, 0.015625
    %v463 = vmul.f32 %v382, 0.015625
    %v464 = vmul.f32 %v384, 0.015625
    %v465 = vmul.f32 %v386, 0.015625
    %v466 = vmul.f32 %v388, 0.015625
    %v467 = vmul.f32 %v390, 0.015625
    %v468 = vmul.f32 %v392, 0.015625
    %v469 = vmul.f32 %v394, 0.015625
    %v470 = vmul.f32 %v396, 0.015625
    %v471 = vmul.f32 %v398, 0.015625
    %v472 = vmul.f32 %v400, 0.015625
    %v473 = vmul.f32 %v402, 0.015625
    %v474 = vmul.f32 %v404, 0.015625
    %v475 = vmul.f32 %v406, 0.015625
    %v476 = vmul.f32 %v408, 0.015625
    %v477 = vmul.f32 %v410, 0.015625
    %v478 = vmul.f32 %v412, 0.015625
    %v479 = vmul.f32 %v414, 0.015625
    %v480 = vmul.f32 %v416, 0.015625
    %v481 = vsub.f32 %v94, %v290
    %v482 = vsub.f32 %v96, %v292
    %v483 = vsub.f32 %v98, %v294
    %v484 = vsub.f32 %v100, %v296
    %v485 = vsub.f32 %v102, %v298
    %v486 = vsub.f32 %v104, %v300
    %v487 = vsub.f32 %v106, %v302
    %v488 = vsub.f32 %v108, %v304
    %v489 = vsub.f32 %v110, %v306
    %v490 = vsub.f32 %v112, %v308
    %v491 = vsub.f32 %v114, %v310
    %v492 = vsub.f32 %v116, %v312
    %v493 = vsub.f32 %v118, %v314
    %v494 = vsub.f32 %v120, %v316
    %v495 = vsub.f32 %v122, %v318
    %v496 = vsub.f32 %v124, %v320
    %v497 = vsub.f32 %v126, %v322
    %v498 = vsub.f32 %v128, %v324
    %v499 = vsub.f32 %v130, %v326
    %v500 = vsub.f32 %v132, %v328
    %v501 = vsub.f32 %v134, %v330
    %v502 = vsub.f32 %v136, %v332
    %v503 = vsub.f32 %v138, %v334
    %v504 = vsub.f32 %v140, %v336
    %v505 = vsub.f32 %v142, %v338
    %v506 = vsub.f32 %v144, %v340
    %v507 = vsub.f32 %v146, %v342
    %v508 = vsub.f32 %v148, %v344
    %v509 = vsub.f32 %v150, %v346
    %v510 = vsub.f32 %v152, %v348
    %v511 = vsub.f32 %v154, %v350
    %v512 = vsub.f32 %v156, %v352
    %v513 = vsub.f32 %v158, %v354
    %v514 = vsub.f32 %v160, %v356
    %v515 = vsub.f32 %v162, %v358
    %v516 = vsub.f32 %v164, %v360
    %v517 = vsub.f32 %v166, %v362
    %v518 = vsub.f32 %v168, %v364
    %v519 = vsub.f32 %v170, %v366
    %v520 = vsub.f32 %v172, %v368
    %v521 = vsub.f32 %v174, %v370
    %v522 = vsub.f32 %v176, %v372
    %v523 = vsub.f32 %v178, %v374
    %v524 = vsub.f32 %v180, %v376
    %v525 = vsub.f32 %v182, %v378
    %v526 = vsub.f32 %v184, %v380
    %v527 = vsub.f32 %v186, %v382
    %v528 = vsub.f32 %v188, %v384
    %v529 = vsub.f32 %v190, %v386
    %v530 = vsub.f32 %v192, %v388
    %v531 = vsub.f32 %v194, %v390
    %v532 = vsub.f32 %v196, %v392
    %v533 = vsub.f32 %v198, %v394
    %v534 = vsub.f32 %v200, %v396
    %v535 = vsub.f32 %v202, %v398
    %v536 = vsub.f32 %v204, %v400
    %v537 = vsub.f32 %v206, %v402
    %v538 = vsub.f32 %v208, %v404
    %v539 = vsub.f32 %v210, %v406
    %v540 = vsub.f32 %v212, %v408
    %v541 = vsub.f32 %v214, %v410
    %v542 = vsub.f32 %v216, %v412
    %v543 = vsub.f32 %v218, %v414
    %v544 = vsub.f32 %v220, %v416
    %v545 = vmul.f32 %v481, 0.015625
    %v546 = vmul.f32 %v482, 0.015625
    %v547 = vmul.f32 %v483, 0.015625
    %v548 = vmul.f32 %v484, 0.015625
    %v549 = vmul.f32 %v485, 0.015625
    %v550 = vmul.f32 %v486, 0.015625
    %v551 = vmul.f32 %v487, 0.015625
    %v552 = vmul.f32 %v488, 0.015625
    %v553 = vmul.f32 %v489, 0.015625
    %v554 = vmul.f32 %v490, 0.015625
    %v555 = vmul.f32 %v491, 0.015625
    %v556 = vmul.f32 %v492, 0.015625
    %v557 = vmul.f32 %v493, 0.015625
    %v558 = vmul.f32 %v494, 0.015625
    %v559 = vmul.f32 %v495, 0.015625
    %v560 = vmul.f32 %v496, 0.015625
    %v561 = vmul.f32 %v497, 0.015625
    %v562 = vmul.f32 %v498, 0.015625
    %v563 = vmul.f32 %v499, 0.015625
    %v564 = vmul.f32 %v500, 0.015625
    %v565 = vmul.f32 %v501, 0.015625
    %v566 = vmul.f32 %v502, 0.015625
    %v567 = vmul.f32 %v503, 0.015625
    %v568 = vmul.f32 %v504, 0.015625
    %v569 = vmul.f32 %v505, 0.015625
    %v570 = vmul.f32 %v506, 0.015625
    %v571 = vmul.f32 %v507, 0.015625
    %v572 = vmul.f32 %v508, 0.015625
    %v573 = vmul.f32 %v509, 0.015625
    %v574 = vmul.f32 %v510, 0.015625
    %v575 = vmul.f32 %v511, 0.015625
    %v576 = vmul.f32 %v512, 0.015625
    %v577 = vmul.f32 %v513, 0.015625
    %v578 = vmul.f32 %v514, 0.015625
    %v579 = vmul.f32 %v515, 0.015625
    %v580 = vmul.f32 %v516, 0.015625
    %v581 = vmul.f32 %v517, 0.015625
    %v582 = vmul.f32 %v518, 0.015625
    %v583 = vmul.f32 %v519, 0.015625
    %v584 = vmul.f32 %v520, 0.015625
    %v585 = vmul.f32 %v521, 0.015625
    %v586 = vmul.f32 %v522, 0.015625
    %v587 = vmul.f32 %v523, 0.015625
    %v588 = vmul.f32 %v524, 0.015625
    %v589 = vmul.f32 %v525, 0.015625
    %v590 = vmul.f32 %v526, 0.015625
    %v591 = vmul.f32 %v527, 0.015625
    %v592 = vmul.f32 %v528, 0.015625
    %v593 = vmul.f32 %v529, 0.015625
    %v594 = vmul.f32 %v530, 0.015625
    %v595 = vmul.f32 %v531, 0.015625
    %v596 = vmul.f32 %v532, 0.015625
    %v597 = vmul.f32 %v533, 0.015625
    %v598 = vmul.f32 %v534, 0.015625
    %v599 = vmul.f32 %v535, 0.015625
    %v600 = vmul.f32 %v536, 0.015625
    %v601 = vmul.f32 %v537, 0.015625
    %v602 = vmul.f32 %v538, 0.015625
    %v603 = vmul.f32 %v539, 0.015625
    %v604 = vmul.f32 %v540, 0.015625
    %v605 = vmul.f32 %v541, 0.015625
    %v606 = vmul.f32 %v542, 0.015625
    %v607 = vmul.f32 %v543, 0.015625
    %v608 = vmul.f32 %v544, 0.015625
    %v609 = vsub.f32 %v417, %v545
    %v610 = vsub.f32 %v418, %v546
    %v611 = vsub.f32 %v419, %v547
    %v612 = vsub.f32 %v420, %v548
    %v613 = vsub.f32 %v421, %v549
    %v614 = vsub.f32 %v422, %v550
    %v615 = vsub.f32 %v423, %v551
    %v616 = vsub.f32 %v424, %v552
    %v617 = vsub.f32 %v425, %v553
    %v618 = vsub.f32 %v426, %v554
    %v619 = vsub.f32 %v427, %v555
    %v620 = vsub.f32 %v428, %v556
    %v621 = vsub.f32 %v429, %v557
    %v622 = vsub.f32 %v430, %v558
    %v623 = vsub.f32 %v431, %v559
    %v624 = vsub.f32 %v432, %v560
    %v625 = vsub.f32 %v433, %v561
    %v626 = vsub.f32 %v434, %v562
    %v627 = vsub.f32 %v435, %v563
    %v628 = vsub.f32 %v436, %v564
    %v629 = vsub.f32 %v437, %v565
    %v630 = vsub.f32 %v438, %v566
    %v631 = vsub.f32 %v439, %v567
    %v632 = vsub.f32 %v440, %v568
    %v633 = vsub.f32 %v441, %v569
    %v634 = vsub.f32 %v442, %v570
    %v635 = vsub.f32 %v443, %v571
    %v636 = vsub.f32 %v444, %v572
    %v637 = vsub.f32 %v445, %v573
    %v638 = vsub.f32 %v446, %v574
    %v639 = vsub.f32 %v447, %v575
    %v640 = vsub.f32 %v448, %v576
    %v641 = vsub.f32 %v449, %v577
    %v642 = vsub.f32 %v450, %v578
    %v643 = vsub.f32 %v451, %v579
    %v644 = vsub.f32 %v452, %v580
    %v645 = vsub.f32 %v453, %v581
    %v646 = vsub.f32 %v454, %v582
    %v647 = vsub.f32 %v455, %v583
    %v648 = vsub.f32 %v456, %v584
    %v649 = vsub.f32 %v457, %v585
    %v650 = vsub.f32 %v458, %v586
    %v651 = vsub.f32 %v459, %v587
    %v652 = vsub.f32 %v460, %v588
    %v653 = vsub.f32 %v461, %v589
    %v654 = vsub.f32 %v462, %v590
    %v655 = vsub.f32 %v463, %v591
    %v656 = vsub.f32 %v464, %v592
    %v657 = vsub.f32 %v465, %v593
    %v658 = vsub.f32 %v466, %v594
    %v659 = vsub.f32 %v467, %v595
    %v660 = vsub.f32 %v468, %v596
    %v661 = vsub.f32 %v469, %v597
    %v662 = vsub.f32 %v470, %v598
    %v663 = vsub.f32 %v471, %v599
    %v664 = vsub.f32 %v472, %v600
    %v665 = vsub.f32 %v473, %v601
    %v666 = vsub.f32 %v474, %v602
    %v667 = vsub.f32 %v475, %v603
    %v668 = vsub.f32 %v476, %v604
    %v669 = vsub.f32 %v477, %v605
    %v670 = vsub.f32 %v478, %v606
    %v671 = vsub.f32 %v479, %v607
    %v672 = vsub.f32 %v480, %v608
    %v673 = vmul.f32 %v224, %v609
    %v674 = vmul.f32 %v224, %v610
    %v675 = vmul.f32 %v224, %v611
    %v676 = vmul.f32 %v224, %v612
    %v677 = vmul.f32 %v224, %v613
    %v678 = vmul.f32 %v224, %v614
    %v679 = vmul.f32 %v224, %v615
    %v680 = vmul.f32 %v224, %v616
    %v681 = vmul.f32 %v224, %v617
    %v682 = vmul.f32 %v224, %v618
    %v683 = vmul.f32 %v224, %v619
    %v684 = vmul.f32 %v224, %v620
    %v685 = vmul.f32 %v224, %v621
    %v686 = vmul.f32 %v224, %v622
    %v687 = vmul.f32 %v224, %v623
    %v688 = vmul.f32 %v224, %v624
    %v689 = vmul.f32 %v224, %v625
    %v690 = vmul.f32 %v224, %v626
    %v691 = vmul.f32 %v224, %v627
    %v692 = vmul.f32 %v224, %v628
    %v693 = vmul.f32 %v224, %v629
    %v694 = vmul.f32 %v224, %v630
    %v695 = vmul.f32 %v224, %v631
    %v696 = vmul.f32 %v224, %v632
    %v697 = vmul.f32 %v224, %v633
    %v698 = vmul.f32 %v224, %v634
    %v699 = vmul.f32 %v224, %v635
    %v700 = vmul.f32 %v224, %v636
    %v701 = vmul.f32 %v224, %v637
    %v702 = vmul.f32 %v224, %v638
    %v703 = vmul.f32 %v224, %v639
    %v704 = vmul.f32 %v224, %v640
    %v705 = vmul.f32 %v224, %v641
    %v706 = vmul.f32 %v224, %v642
    %v707 = vmul.f32 %v224, %v643
    %v708 = vmul.f32 %v224, %v644
    %v709 = vmul.f32 %v224, %v645
    %v710 = vmul.f32 %v224, %v646
    %v711 = vmul.f32 %v224, %v647
    %v712 = vmul.f32 %v224, %v648
    %v713 = vmul.f32 %v224, %v649
    %v714 = vmul.f32 %v224, %v650
    %v715 = vmul.f32 %v224, %v651
    %v716 = vmul.f32 %v224, %v652
    %v717 = vmul.f32 %v224, %v653
    %v718 = vmul.f32 %v224, %v654
    %v719 = vmul.f32 %v224, %v655
    %v720 = vmul.f32 %v224, %v656
    %v721 = vmul.f32 %v224, %v657
    %v722 = vmul.f32 %v224, %v658
    %v723 = vmul.f32 %v224, %v659
    %v724 = vmul.f32 %v224, %v660
    %v725 = vmul.f32 %v224, %v661
    %v726 = vmul.f32 %v224, %v662
    %v727 = vmul.f32 %v224, %v663
    %v728 = vmul.f32 %v224, %v664
    %v729 = vmul.f32 %v224, %v665
    %v730 = vmul.f32 %v224, %v666
    %v731 = vmul.f32 %v224, %v667
    %v732 = vmul.f32 %v224, %v668
    %v733 = vmul.f32 %v224, %v669
    %v734 = vmul.f32 %v224, %v670
    %v735 = vmul.f32 %v224, %v671
    %v736 = vmul.f32 %v224, %v672
    %v737 = vadd.f32 %v545, %v673
    %v738 = vadd.f32 %v546, %v674
    %v739 = vadd.f32 %v547, %v675
    %v740 = vadd.f32 %v548, %v676
    %v741 = vadd.f32 %v549, %v677
    %v742 = vadd.f32 %v550, %v678
    %v743 = vadd.f32 %v551, %v679
    %v744 = vadd.f32 %v552, %v680
    %v745 = vadd.f32 %v553, %v681
    %v746 = vadd.f32 %v554, %v682
    %v747 = vadd.f32 %v555, %v683
    %v748 = vadd.f32 %v556, %v684
    %v749 = vadd.f32 %v557, %v685
    %v750 = vadd.f32 %v558, %v686
    %v751 = vadd.f32 %v559, %v687
    %v752 = vadd.f32 %v560, %v688
    %v753 = vadd.f32 %v561, %v689
    %v754 = vadd.f32 %v562, %v690
    %v755 = vadd.f32 %v563, %v691
    %v756 = vadd.f32 %v564, %v692
    %v757 = vadd.f32 %v565, %v693
    %v758 = vadd.f32 %v566, %v694
    %v759 = vadd.f32 %v567, %v695
    %v760 = vadd.f32 %v568, %v696
    %v761 = vadd.f32 %v569, %v697
    %v762 = vadd.f32 %v570, %v698
    %v763 = vadd.f32 %v571, %v699
    %v764 = vadd.f32 %v572, %v700
    %v765 = vadd.f32 %v573, %v701
    %v766 = vadd.f32 %v574, %v702
    %v767 = vadd.f32 %v575, %v703
    %v768 = vadd.f32 %v576, %v704
    %v769 = vadd.f32 %v577, %v705
    %v770 = vadd.f32 %v578, %v706
    %v771 = vadd.f32 %v579, %v707
    %v772 = vadd.f32 %v580, %v708
    %v773 = vadd.f32 %v581, %v709
    %v774 = vadd.f32 %v582, %v710
    %v775 = vadd.f32 %v583, %v711
    %v776 = vadd.f32 %v584, %v712
    %v777 = vadd.f32 %v585, %v713
    %v778 = vadd.f32 %v586, %v714
    %v779 = vadd.f32 %v587, %v715
    %v780 = vadd.f32 %v588, %v716
    %v781 = vadd.f32 %v589, %v717
    %v782 = vadd.f32 %v590, %v718
    %v783 = vadd.f32 %v591, %v719
    %v784 = vadd.f32 %v592, %v720
    %v785 = vadd.f32 %v593, %v721
    %v786 = vadd.f32 %v594, %v722
    %v787 = vadd.f32 %v595, %v723
    %v788 = vadd.f32 %v596, %v724
    %v789 = vadd.f32 %v597, %v725
    %v790 = vadd.f32 %v598, %v726
    %v791 = vadd.f32 %v599, %v727
    %v792 = vadd.f32 %v600, %v728
    %v793 = vadd.f32 %v601, %v729
    %v794 = vadd.f32 %v602, %v730
    %v795 = vadd.f32 %v603, %v731
    %v796 = vadd.f32 %v604, %v732
    %v797 = vadd.f32 %v605, %v733
    %v798 = vadd.f32 %v606, %v734
    %v799 = vadd.f32 %v607, %v735
    %v800 = vadd.f32 %v608, %v736
    %v801 = vsub.f32 %v26, %v737
    %v802 = vsub.f32 %v27, %v738
    %v803 = vsub.f32 %v28, %v739
    %v804 = vsub.f32 %v29, %v740
    %v805 = vsub.f32 %v30, %v741
    %v806 = vsub.f32 %v31, %v742
    %v807 = vsub.f32 %v32, %v743
    %v808 = vsub.f32 %v33, %v744
    %v809 = vsub.f32 %v34, %v745
    %v810 = vsub.f32 %v35, %v746
    %v811 = vsub.f32 %v36, %v747
    %v812 = vsub.f32 %v37, %v748
    %v813 = vsub.f32 %v38, %v749
    %v814 = vsub.f32 %v39, %v750
    %v815 = vsub.f32 %v40, %v751
    %v816 = vsub.f32 %v41, %v752
    %v817 = vsub.f32 %v42, %v753
    %v818 = vsub.f32 %v43, %v754
    %v819 = vsub.f32 %v44, %v755
    %v820 = vsub.f32 %v45, %v756
    %v821 = vsub.f32 %v46, %v757
    %v822 = vsub.f32 %v47, %v758
    %v823 = vsub.f32 %v48, %v759
    %v824 = vsub.f32 %v49, %v760
    %v825 = vsub.f32 %v50, %v761
    %v826 = vsub.f32 %v51, %v762
    %v827 = vsub.f32 %v52, %v763
    %v828 = vsub.f32 %v53, %v764
    %v829 = vsub.f32 %v54, %v765
    %v830 = vsub.f32 %v55, %v766
    %v831 = vsub.f32 %v56, %v767
    %v832 = vsub.f32 %v57, %v768
    %v833 = vsub.f32 %v58, %v769
    %v834 = vsub.f32 %v59, %v770
    %v835 = vsub.f32 %v60, %v771
    %v836 = vsub.f32 %v61, %v772
    %v837 = vsub.f32 %v62, %v773
    %v838 = vsub.f32 %v63, %v774
    %v839 = vsub.f32 %v64, %v775
    %v840 = vsub.f32 %v65, %v776
    %v841 = vsub.f32 %v66, %v777
    %v842 = vsub.f32 %v67, %v778
    %v843 = vsub.f32 %v68, %v779
    %v844 = vsub.f32 %v69, %v780
    %v845 = vsub.f32 %v70, %v781
    %v846 = vsub.f32 %v71, %v782
    %v847 = vsub.f32 %v72, %v783
    %v848 = vsub.f32 %v73, %v784
    %v849 = vsub.f32 %v74, %v785
    %v850 = vsub.f32 %v75, %v786
    %v851 = vsub.f32 %v76, %v787
    %v852 = vsub.f32 %v77, %v788
    %v853 = vsub.f32 %v78, %v789
    %v854 = vsub.f32 %v79, %v790
    %v855 = vsub.f32 %v80, %v791
    %v856 = vsub.f32 %v81, %v792
    %v857 = vsub.f32 %v82, %v793
    %v858 = vsub.f32 %v83, %v794
    %v859 = vsub.f32 %v84, %v795
    %v860 = vsub.f32 %v85, %v796
    %v861 = vsub.f32 %v86, %v797
    %v862 = vsub.f32 %v87, %v798
    %v863 = vsub.f32 %v88, %v799
    %v864 = vsub.f32 %v89, %v800
    %v865 = vmul.f32 %v801, %v801
    %v866 = vmul.f32 %v802, %v802
    %v867 = vmul.f32 %v803, %v803
    %v868 = vmul.f32 %v804, %v804
    %v869 = vmul.f32 %v805, %v805
    %v870 = vmul.f32 %v806, %v806
    %v871 = vmul.f32 %v807, %v807
    %v872 = vmul.f32 %v808, %v808
    %v873 = vmul.f32 %v809, %v809
    %v874 = vmul.f32 %v810, %v810
    %v875 = vmul.f32 %v811, %v811
    %v876 = vmul.f32 %v812, %v812
    %v877 = vmul.f32 %v813, %v813
    %v878 = vmul.f32 %v814, %v814
    %v879 = vmul.f32 %v815, %v815
    %v880 = vmul.f32 %v816, %v816
    %v881 = vmul.f32 %v817, %v817
    %v882 = vmul.f32 %v818, %v818
    %v883 = vmul.f32 %v819, %v819
    %v884 = vmul.f32 %v820, %v820
    %v885 = vmul.f32 %v821, %v821
    %v886 = vmul.f32 %v822, %v822
    %v887 = vmul.f32 %v823, %v823
    %v888 = vmul.f32 %v824, %v824
    %v889 = vmul.f32 %v825, %v825
    %v890 = vmul.f32 %v826, %v826
    %v891 = vmul.f32 %v827, %v827
    %v892 = vmul.f32 %v828, %v828
    %v893 = vmul.f32 %v829, %v829
    %v894 = vmul.f32 %v830, %v830
    %v895 = vmul.f32 %v831, %v831
    %v896 = vmul.f32 %v832, %v832
    %v897 = vmul.f32 %v833, %v833
    %v898 = vmul.f32 %v834, %v834
    %v899 = vmul.f32 %v835, %v835
    %v900 = vmul.f32 %v836, %v836
    %v901 = vmul.f32 %v837, %v837
    %v902 = vmul.f32 %v838, %v838
    %v903 = vmul.f32 %v839, %v839
    %v904 = vmul.f32 %v840, %v840
    %v905 = vmul.f32 %v841, %v841
    %v906 = vmul.f32 %v842, %v842
    %v907 = vmul.f32 %v843, %v843
    %v908 = vmul.f32 %v844, %v844
    %v909 = vmul.f32 %v845, %v845
    %v910 = vmul.f32 %v846, %v846
    %v911 = vmul.f32 %v847, %v847
    %v912 = vmul.f32 %v848, %v848
    %v913 = vmul.f32 %v849, %v849
    %v914 = vmul.f32 %v850, %v850
    %v915 = vmul.f32 %v851, %v851
    %v916 = vmul.f32 %v852, %v852
    %v917 = vmul.f32 %v853, %v853
    %v918 = vmul.f32 %v854, %v854
    %v919 = vmul.f32 %v855, %v855
    %v920 = vmul.f32 %v856, %v856
    %v921 = vmul.f32 %v857, %v857
    %v922 = vmul.f32 %v858, %v858
    %v923 = vmul.f32 %v859, %v859
    %v924 = vmul.f32 %v860, %v860
    %v925 = vmul.f32 %v861, %v861
    %v926 = vmul.f32 %v862, %v862
    %v927 = vmul.f32 %v863, %v863
    %v928 = vmul.f32 %v864, %v864
    %929 = vadd.xlane.f32.xlu0 %v865
    %v930 = vpop.xlane.xlu0 %929
    %931 = vadd.xlane.f32.xlu0 %v866
    %v932 = vpop.xlane.xlu0 %931
    %933 = vadd.xlane.f32.xlu0 %v867
    %v934 = vpop.xlane.xlu0 %933
    %935 = vadd.xlane.f32.xlu0 %v868
    %v936 = vpop.xlane.xlu0 %935
    %937 = vadd.xlane.f32.xlu0 %v869
    %v938 = vpop.xlane.xlu0 %937
    %939 = vadd.xlane.f32.xlu0 %v870
    %v940 = vpop.xlane.xlu0 %939
    %941 = vadd.xlane.f32.xlu0 %v871
    %v942 = vpop.xlane.xlu0 %941
    %943 = vadd.xlane.f32.xlu0 %v872
    %v944 = vpop.xlane.xlu0 %943
    %945 = vadd.xlane.f32.xlu0 %v873
    %v946 = vpop.xlane.xlu0 %945
    %947 = vadd.xlane.f32.xlu0 %v874
    %v948 = vpop.xlane.xlu0 %947
    %949 = vadd.xlane.f32.xlu0 %v875
    %v950 = vpop.xlane.xlu0 %949
    %951 = vadd.xlane.f32.xlu0 %v876
    %v952 = vpop.xlane.xlu0 %951
    %953 = vadd.xlane.f32.xlu0 %v877
    %v954 = vpop.xlane.xlu0 %953
    %955 = vadd.xlane.f32.xlu0 %v878
    %v956 = vpop.xlane.xlu0 %955
    %957 = vadd.xlane.f32.xlu0 %v879
    %v958 = vpop.xlane.xlu0 %957
    %959 = vadd.xlane.f32.xlu0 %v880
    %v960 = vpop.xlane.xlu0 %959
    %961 = vadd.xlane.f32.xlu0 %v881
    %v962 = vpop.xlane.xlu0 %961
    %963 = vadd.xlane.f32.xlu0 %v882
    %v964 = vpop.xlane.xlu0 %963
    %965 = vadd.xlane.f32.xlu0 %v883
    %v966 = vpop.xlane.xlu0 %965
    %967 = vadd.xlane.f32.xlu0 %v884
    %v968 = vpop.xlane.xlu0 %967
    %969 = vadd.xlane.f32.xlu0 %v885
    %v970 = vpop.xlane.xlu0 %969
    %971 = vadd.xlane.f32.xlu0 %v886
    %v972 = vpop.xlane.xlu0 %971
    %973 = vadd.xlane.f32.xlu0 %v887
    %v974 = vpop.xlane.xlu0 %973
    %975 = vadd.xlane.f32.xlu0 %v888
    %v976 = vpop.xlane.xlu0 %975
    %977 = vadd.xlane.f32.xlu0 %v889
    %v978 = vpop.xlane.xlu0 %977
    %979 = vadd.xlane.f32.xlu0 %v890
    %v980 = vpop.xlane.xlu0 %979
    %981 = vadd.xlane.f32.xlu0 %v891
    %v982 = vpop.xlane.xlu0 %981
    %983 = vadd.xlane.f32.xlu0 %v892
    %v984 = vpop.xlane.xlu0 %983
    %985 = vadd.xlane.f32.xlu0 %v893
    %v986 = vpop.xlane.xlu0 %985
    %987 = vadd.xlane.f32.xlu0 %v894
    %v988 = vpop.xlane.xlu0 %987
    %989 = vadd.xlane.f32.xlu0 %v895
    %v990 = vpop.xlane.xlu0 %989
    %991 = vadd.xlane.f32.xlu0 %v896
    %v992 = vpop.xlane.xlu0 %991
    %993 = vadd.xlane.f32.xlu0 %v897
    %v994 = vpop.xlane.xlu0 %993
    %995 = vadd.xlane.f32.xlu0 %v898
    %v996 = vpop.xlane.xlu0 %995
    %997 = vadd.xlane.f32.xlu0 %v899
    %v998 = vpop.xlane.xlu0 %997
    %999 = vadd.xlane.f32.xlu0 %v900
    %v1000 = vpop.xlane.xlu0 %999
    %1001 = vadd.xlane.f32.xlu0 %v901
    %v1002 = vpop.xlane.xlu0 %1001
    %1003 = vadd.xlane.f32.xlu0 %v902
    %v1004 = vpop.xlane.xlu0 %1003
    %1005 = vadd.xlane.f32.xlu0 %v903
    %v1006 = vpop.xlane.xlu0 %1005
    %1007 = vadd.xlane.f32.xlu0 %v904
    %v1008 = vpop.xlane.xlu0 %1007
    %1009 = vadd.xlane.f32.xlu0 %v905
    %v1010 = vpop.xlane.xlu0 %1009
    %1011 = vadd.xlane.f32.xlu0 %v906
    %v1012 = vpop.xlane.xlu0 %1011
    %1013 = vadd.xlane.f32.xlu0 %v907
    %v1014 = vpop.xlane.xlu0 %1013
    %1015 = vadd.xlane.f32.xlu0 %v908
    %v1016 = vpop.xlane.xlu0 %1015
    %1017 = vadd.xlane.f32.xlu0 %v909
    %v1018 = vpop.xlane.xlu0 %1017
    %1019 = vadd.xlane.f32.xlu0 %v910
    %v1020 = vpop.xlane.xlu0 %1019
    %1021 = vadd.xlane.f32.xlu0 %v911
    %v1022 = vpop.xlane.xlu0 %1021
    %1023 = vadd.xlane.f32.xlu0 %v912
    %v1024 = vpop.xlane.xlu0 %1023
    %1025 = vadd.xlane.f32.xlu0 %v913
    %v1026 = vpop.xlane.xlu0 %1025
    %1027 = vadd.xlane.f32.xlu0 %v914
    %v1028 = vpop.xlane.xlu0 %1027
    %1029 = vadd.xlane.f32.xlu0 %v915
    %v1030 = vpop.xlane.xlu0 %1029
    %1031 = vadd.xlane.f32.xlu0 %v916
    %v1032 = vpop.xlane.xlu0 %1031
    %1033 = vadd.xlane.f32.xlu0 %v917
    %v1034 = vpop.xlane.xlu0 %1033
    %1035 = vadd.xlane.f32.xlu0 %v918
    %v1036 = vpop.xlane.xlu0 %1035
    %1037 = vadd.xlane.f32.xlu0 %v919
    %v1038 = vpop.xlane.xlu0 %1037
    %1039 = vadd.xlane.f32.xlu0 %v920
    %v1040 = vpop.xlane.xlu0 %1039
    %1041 = vadd.xlane.f32.xlu0 %v921
    %v1042 = vpop.xlane.xlu0 %1041
    %1043 = vadd.xlane.f32.xlu0 %v922
    %v1044 = vpop.xlane.xlu0 %1043
    %1045 = vadd.xlane.f32.xlu0 %v923
    %v1046 = vpop.xlane.xlu0 %1045
    %1047 = vadd.xlane.f32.xlu0 %v924
    %v1048 = vpop.xlane.xlu0 %1047
    %1049 = vadd.xlane.f32.xlu0 %v925
    %v1050 = vpop.xlane.xlu0 %1049
    %1051 = vadd.xlane.f32.xlu0 %v926
    %v1052 = vpop.xlane.xlu0 %1051
    %1053 = vadd.xlane.f32.xlu0 %v927
    %v1054 = vpop.xlane.xlu0 %1053
    %1055 = vadd.xlane.f32.xlu0 %v928
    %v1056 = vpop.xlane.xlu0 %1055
    %v1057 = vmul.f32 %v930, 0.015873017
    %v1058 = vmul.f32 %v932, 0.015873017
    %v1059 = vmul.f32 %v934, 0.015873017
    %v1060 = vmul.f32 %v936, 0.015873017
    %v1061 = vmul.f32 %v938, 0.015873017
    %v1062 = vmul.f32 %v940, 0.015873017
    %v1063 = vmul.f32 %v942, 0.015873017
    %v1064 = vmul.f32 %v944, 0.015873017
    %v1065 = vmul.f32 %v946, 0.015873017
    %v1066 = vmul.f32 %v948, 0.015873017
    %v1067 = vmul.f32 %v950, 0.015873017
    %v1068 = vmul.f32 %v952, 0.015873017
    %v1069 = vmul.f32 %v954, 0.015873017
    %v1070 = vmul.f32 %v956, 0.015873017
    %v1071 = vmul.f32 %v958, 0.015873017
    %v1072 = vmul.f32 %v960, 0.015873017
    %v1073 = vmul.f32 %v962, 0.015873017
    %v1074 = vmul.f32 %v964, 0.015873017
    %v1075 = vmul.f32 %v966, 0.015873017
    %v1076 = vmul.f32 %v968, 0.015873017
    %v1077 = vmul.f32 %v970, 0.015873017
    %v1078 = vmul.f32 %v972, 0.015873017
    %v1079 = vmul.f32 %v974, 0.015873017
    %v1080 = vmul.f32 %v976, 0.015873017
    %v1081 = vmul.f32 %v978, 0.015873017
    %v1082 = vmul.f32 %v980, 0.015873017
    %v1083 = vmul.f32 %v982, 0.015873017
    %v1084 = vmul.f32 %v984, 0.015873017
    %v1085 = vmul.f32 %v986, 0.015873017
    %v1086 = vmul.f32 %v988, 0.015873017
    %v1087 = vmul.f32 %v990, 0.015873017
    %v1088 = vmul.f32 %v992, 0.015873017
    %v1089 = vmul.f32 %v994, 0.015873017
    %v1090 = vmul.f32 %v996, 0.015873017
    %v1091 = vmul.f32 %v998, 0.015873017
    %v1092 = vmul.f32 %v1000, 0.015873017
    %v1093 = vmul.f32 %v1002, 0.015873017
    %v1094 = vmul.f32 %v1004, 0.015873017
    %v1095 = vmul.f32 %v1006, 0.015873017
    %v1096 = vmul.f32 %v1008, 0.015873017
    %v1097 = vmul.f32 %v1010, 0.015873017
    %v1098 = vmul.f32 %v1012, 0.015873017
    %v1099 = vmul.f32 %v1014, 0.015873017
    %v1100 = vmul.f32 %v1016, 0.015873017
    %v1101 = vmul.f32 %v1018, 0.015873017
    %v1102 = vmul.f32 %v1020, 0.015873017
    %v1103 = vmul.f32 %v1022, 0.015873017
    %v1104 = vmul.f32 %v1024, 0.015873017
    %v1105 = vmul.f32 %v1026, 0.015873017
    %v1106 = vmul.f32 %v1028, 0.015873017
    %v1107 = vmul.f32 %v1030, 0.015873017
    %v1108 = vmul.f32 %v1032, 0.015873017
    %v1109 = vmul.f32 %v1034, 0.015873017
    %v1110 = vmul.f32 %v1036, 0.015873017
    %v1111 = vmul.f32 %v1038, 0.015873017
    %v1112 = vmul.f32 %v1040, 0.015873017
    %v1113 = vmul.f32 %v1042, 0.015873017
    %v1114 = vmul.f32 %v1044, 0.015873017
    %v1115 = vmul.f32 %v1046, 0.015873017
    %v1116 = vmul.f32 %v1048, 0.015873017
    %v1117 = vmul.f32 %v1050, 0.015873017
    %v1118 = vmul.f32 %v1052, 0.015873017
    %v1119 = vmul.f32 %v1054, 0.015873017
    %v1120 = vmul.f32 %v1056, 0.015873017
    %v1121 = vrsqrt.pop %v1057
    %v1122 = vmul.f32 %v1057, %v1121
    %vm1123 = vcmp.eq.f32.partialorder %v1057, inf
    %v1124 = vsel %vm1123, %v1057, %v1122
    %vm1125 = vcmp.eq.f32.partialorder %v1057, 0.0
    %v1126 = vand.u32 %v1057, 2147483648
    %v1127 = vsel %vm1125, %v1126, %v1124
    %v1128 = vrsqrt.pop %v1058
    %v1129 = vmul.f32 %v1058, %v1128
    %vm1130 = vcmp.eq.f32.partialorder %v1058, inf
    %v1131 = vsel %vm1130, %v1058, %v1129
    %vm1132 = vcmp.eq.f32.partialorder %v1058, 0.0
    %v1133 = vand.u32 %v1058, 2147483648
    %v1134 = vsel %vm1132, %v1133, %v1131
    %v1135 = vrsqrt.pop %v1059
    %v1136 = vmul.f32 %v1059, %v1135
    %vm1137 = vcmp.eq.f32.partialorder %v1059, inf
    %v1138 = vsel %vm1137, %v1059, %v1136
    %vm1139 = vcmp.eq.f32.partialorder %v1059, 0.0
    %v1140 = vand.u32 %v1059, 2147483648
    %v1141 = vsel %vm1139, %v1140, %v1138
    %v1142 = vrsqrt.pop %v1060
    %v1143 = vmul.f32 %v1060, %v1142
    %vm1144 = vcmp.eq.f32.partialorder %v1060, inf
    %v1145 = vsel %vm1144, %v1060, %v1143
    %vm1146 = vcmp.eq.f32.partialorder %v1060, 0.0
    %v1147 = vand.u32 %v1060, 2147483648
    %v1148 = vsel %vm1146, %v1147, %v1145
    %v1149 = vrsqrt.pop %v1061
    %v1150 = vmul.f32 %v1061, %v1149
    %vm1151 = vcmp.eq.f32.partialorder %v1061, inf
    %v1152 = vsel %vm1151, %v1061, %v1150
    %vm1153 = vcmp.eq.f32.partialorder %v1061, 0.0
    %v1154 = vand.u32 %v1061, 2147483648
    %v1155 = vsel %vm1153, %v1154, %v1152
    %v1156 = vrsqrt.pop %v1062
    %v1157 = vmul.f32 %v1062, %v1156
    %vm1158 = vcmp.eq.f32.partialorder %v1062, inf
    %v1159 = vsel %vm1158, %v1062, %v1157
    %vm1160 = vcmp.eq.f32.partialorder %v1062, 0.0
    %v1161 = vand.u32 %v1062, 2147483648
    %v1162 = vsel %vm1160, %v1161, %v1159
    %v1163 = vrsqrt.pop %v1063
    %v1164 = vmul.f32 %v1063, %v1163
    %vm1165 = vcmp.eq.f32.partialorder %v1063, inf
    %v1166 = vsel %vm1165, %v1063, %v1164
    %vm1167 = vcmp.eq.f32.partialorder %v1063, 0.0
    %v1168 = vand.u32 %v1063, 2147483648
    %v1169 = vsel %vm1167, %v1168, %v1166
    %v1170 = vrsqrt.pop %v1064
    %v1171 = vmul.f32 %v1064, %v1170
    %vm1172 = vcmp.eq.f32.partialorder %v1064, inf
    %v1173 = vsel %vm1172, %v1064, %v1171
    %vm1174 = vcmp.eq.f32.partialorder %v1064, 0.0
    %v1175 = vand.u32 %v1064, 2147483648
    %v1176 = vsel %vm1174, %v1175, %v1173
    %v1177 = vrsqrt.pop %v1065
    %v1178 = vmul.f32 %v1065, %v1177
    %vm1179 = vcmp.eq.f32.partialorder %v1065, inf
    %v1180 = vsel %vm1179, %v1065, %v1178
    %vm1181 = vcmp.eq.f32.partialorder %v1065, 0.0
    %v1182 = vand.u32 %v1065, 2147483648
    %v1183 = vsel %vm1181, %v1182, %v1180
    %v1184 = vrsqrt.pop %v1066
    %v1185 = vmul.f32 %v1066, %v1184
    %vm1186 = vcmp.eq.f32.partialorder %v1066, inf
    %v1187 = vsel %vm1186, %v1066, %v1185
    %vm1188 = vcmp.eq.f32.partialorder %v1066, 0.0
    %v1189 = vand.u32 %v1066, 2147483648
    %v1190 = vsel %vm1188, %v1189, %v1187
    %v1191 = vrsqrt.pop %v1067
    %v1192 = vmul.f32 %v1067, %v1191
    %vm1193 = vcmp.eq.f32.partialorder %v1067, inf
    %v1194 = vsel %vm1193, %v1067, %v1192
    %vm1195 = vcmp.eq.f32.partialorder %v1067, 0.0
    %v1196 = vand.u32 %v1067, 2147483648
    %v1197 = vsel %vm1195, %v1196, %v1194
    %v1198 = vrsqrt.pop %v1068
    %v1199 = vmul.f32 %v1068, %v1198
    %vm1200 = vcmp.eq.f32.partialorder %v1068, inf
    %v1201 = vsel %vm1200, %v1068, %v1199
    %vm1202 = vcmp.eq.f32.partialorder %v1068, 0.0
    %v1203 = vand.u32 %v1068, 2147483648
    %v1204 = vsel %vm1202, %v1203, %v1201
    %v1205 = vrsqrt.pop %v1069
    %v1206 = vmul.f32 %v1069, %v1205
    %vm1207 = vcmp.eq.f32.partialorder %v1069, inf
    %v1208 = vsel %vm1207, %v1069, %v1206
    %vm1209 = vcmp.eq.f32.partialorder %v1069, 0.0
    %v1210 = vand.u32 %v1069, 2147483648
    %v1211 = vsel %vm1209, %v1210, %v1208
    %v1212 = vrsqrt.pop %v1070
    %v1213 = vmul.f32 %v1070, %v1212
    %vm1214 = vcmp.eq.f32.partialorder %v1070, inf
    %v1215 = vsel %vm1214, %v1070, %v1213
    %vm1216 = vcmp.eq.f32.partialorder %v1070, 0.0
    %v1217 = vand.u32 %v1070, 2147483648
    %v1218 = vsel %vm1216, %v1217, %v1215
    %v1219 = vrsqrt.pop %v1071
    %v1220 = vmul.f32 %v1071, %v1219
    %vm1221 = vcmp.eq.f32.partialorder %v1071, inf
    %v1222 = vsel %vm1221, %v1071, %v1220
    %vm1223 = vcmp.eq.f32.partialorder %v1071, 0.0
    %v1224 = vand.u32 %v1071, 2147483648
    %v1225 = vsel %vm1223, %v1224, %v1222
    %v1226 = vrsqrt.pop %v1072
    %v1227 = vmul.f32 %v1072, %v1226
    %vm1228 = vcmp.eq.f32.partialorder %v1072, inf
    %v1229 = vsel %vm1228, %v1072, %v1227
    %vm1230 = vcmp.eq.f32.partialorder %v1072, 0.0
    %v1231 = vand.u32 %v1072, 2147483648
    %v1232 = vsel %vm1230, %v1231, %v1229
    %v1233 = vrsqrt.pop %v1073
    %v1234 = vmul.f32 %v1073, %v1233
    %vm1235 = vcmp.eq.f32.partialorder %v1073, inf
    %v1236 = vsel %vm1235, %v1073, %v1234
    %vm1237 = vcmp.eq.f32.partialorder %v1073, 0.0
    %v1238 = vand.u32 %v1073, 2147483648
    %v1239 = vsel %vm1237, %v1238, %v1236
    %v1240 = vrsqrt.pop %v1074
    %v1241 = vmul.f32 %v1074, %v1240
    %vm1242 = vcmp.eq.f32.partialorder %v1074, inf
    %v1243 = vsel %vm1242, %v1074, %v1241
    %vm1244 = vcmp.eq.f32.partialorder %v1074, 0.0
    %v1245 = vand.u32 %v1074, 2147483648
    %v1246 = vsel %vm1244, %v1245, %v1243
    %v1247 = vrsqrt.pop %v1075
    %v1248 = vmul.f32 %v1075, %v1247
    %vm1249 = vcmp.eq.f32.partialorder %v1075, inf
    %v1250 = vsel %vm1249, %v1075, %v1248
    %vm1251 = vcmp.eq.f32.partialorder %v1075, 0.0
    %v1252 = vand.u32 %v1075, 2147483648
    %v1253 = vsel %vm1251, %v1252, %v1250
    %v1254 = vrsqrt.pop %v1076
    %v1255 = vmul.f32 %v1076, %v1254
    %vm1256 = vcmp.eq.f32.partialorder %v1076, inf
    %v1257 = vsel %vm1256, %v1076, %v1255
    %vm1258 = vcmp.eq.f32.partialorder %v1076, 0.0
    %v1259 = vand.u32 %v1076, 2147483648
    %v1260 = vsel %vm1258, %v1259, %v1257
    %v1261 = vrsqrt.pop %v1077
    %v1262 = vmul.f32 %v1077, %v1261
    %vm1263 = vcmp.eq.f32.partialorder %v1077, inf
    %v1264 = vsel %vm1263, %v1077, %v1262
    %vm1265 = vcmp.eq.f32.partialorder %v1077, 0.0
    %v1266 = vand.u32 %v1077, 2147483648
    %v1267 = vsel %vm1265, %v1266, %v1264
    %v1268 = vrsqrt.pop %v1078
    %v1269 = vmul.f32 %v1078, %v1268
    %vm1270 = vcmp.eq.f32.partialorder %v1078, inf
    %v1271 = vsel %vm1270, %v1078, %v1269
    %vm1272 = vcmp.eq.f32.partialorder %v1078, 0.0
    %v1273 = vand.u32 %v1078, 2147483648
    %v1274 = vsel %vm1272, %v1273, %v1271
    %v1275 = vrsqrt.pop %v1079
    %v1276 = vmul.f32 %v1079, %v1275
    %vm1277 = vcmp.eq.f32.partialorder %v1079, inf
    %v1278 = vsel %vm1277, %v1079, %v1276
    %vm1279 = vcmp.eq.f32.partialorder %v1079, 0.0
    %v1280 = vand.u32 %v1079, 2147483648
    %v1281 = vsel %vm1279, %v1280, %v1278
    %v1282 = vrsqrt.pop %v1080
    %v1283 = vmul.f32 %v1080, %v1282
    %vm1284 = vcmp.eq.f32.partialorder %v1080, inf
    %v1285 = vsel %vm1284, %v1080, %v1283
    %vm1286 = vcmp.eq.f32.partialorder %v1080, 0.0
    %v1287 = vand.u32 %v1080, 2147483648
    %v1288 = vsel %vm1286, %v1287, %v1285
    %v1289 = vrsqrt.pop %v1081
    %v1290 = vmul.f32 %v1081, %v1289
    %vm1291 = vcmp.eq.f32.partialorder %v1081, inf
    %v1292 = vsel %vm1291, %v1081, %v1290
    %vm1293 = vcmp.eq.f32.partialorder %v1081, 0.0
    %v1294 = vand.u32 %v1081, 2147483648
    %v1295 = vsel %vm1293, %v1294, %v1292
    %v1296 = vrsqrt.pop %v1082
    %v1297 = vmul.f32 %v1082, %v1296
    %vm1298 = vcmp.eq.f32.partialorder %v1082, inf
    %v1299 = vsel %vm1298, %v1082, %v1297
    %vm1300 = vcmp.eq.f32.partialorder %v1082, 0.0
    %v1301 = vand.u32 %v1082, 2147483648
    %v1302 = vsel %vm1300, %v1301, %v1299
    %v1303 = vrsqrt.pop %v1083
    %v1304 = vmul.f32 %v1083, %v1303
    %vm1305 = vcmp.eq.f32.partialorder %v1083, inf
    %v1306 = vsel %vm1305, %v1083, %v1304
    %vm1307 = vcmp.eq.f32.partialorder %v1083, 0.0
    %v1308 = vand.u32 %v1083, 2147483648
    %v1309 = vsel %vm1307, %v1308, %v1306
    %v1310 = vrsqrt.pop %v1084
    %v1311 = vmul.f32 %v1084, %v1310
    %vm1312 = vcmp.eq.f32.partialorder %v1084, inf
    %v1313 = vsel %vm1312, %v1084, %v1311
    %vm1314 = vcmp.eq.f32.partialorder %v1084, 0.0
    %v1315 = vand.u32 %v1084, 2147483648
    %v1316 = vsel %vm1314, %v1315, %v1313
    %v1317 = vrsqrt.pop %v1085
    %v1318 = vmul.f32 %v1085, %v1317
    %vm1319 = vcmp.eq.f32.partialorder %v1085, inf
    %v1320 = vsel %vm1319, %v1085, %v1318
    %vm1321 = vcmp.eq.f32.partialorder %v1085, 0.0
    %v1322 = vand.u32 %v1085, 2147483648
    %v1323 = vsel %vm1321, %v1322, %v1320
    %v1324 = vrsqrt.pop %v1086
    %v1325 = vmul.f32 %v1086, %v1324
    %vm1326 = vcmp.eq.f32.partialorder %v1086, inf
    %v1327 = vsel %vm1326, %v1086, %v1325
    %vm1328 = vcmp.eq.f32.partialorder %v1086, 0.0
    %v1329 = vand.u32 %v1086, 2147483648
    %v1330 = vsel %vm1328, %v1329, %v1327
    %v1331 = vrsqrt.pop %v1087
    %v1332 = vmul.f32 %v1087, %v1331
    %vm1333 = vcmp.eq.f32.partialorder %v1087, inf
    %v1334 = vsel %vm1333, %v1087, %v1332
    %vm1335 = vcmp.eq.f32.partialorder %v1087, 0.0
    %v1336 = vand.u32 %v1087, 2147483648
    %v1337 = vsel %vm1335, %v1336, %v1334
    %v1338 = vrsqrt.pop %v1088
    %v1339 = vmul.f32 %v1088, %v1338
    %vm1340 = vcmp.eq.f32.partialorder %v1088, inf
    %v1341 = vsel %vm1340, %v1088, %v1339
    %vm1342 = vcmp.eq.f32.partialorder %v1088, 0.0
    %v1343 = vand.u32 %v1088, 2147483648
    %v1344 = vsel %vm1342, %v1343, %v1341
    %v1345 = vrsqrt.pop %v1089
    %v1346 = vmul.f32 %v1089, %v1345
    %vm1347 = vcmp.eq.f32.partialorder %v1089, inf
    %v1348 = vsel %vm1347, %v1089, %v1346
    %vm1349 = vcmp.eq.f32.partialorder %v1089, 0.0
    %v1350 = vand.u32 %v1089, 2147483648
    %v1351 = vsel %vm1349, %v1350, %v1348
    %v1352 = vrsqrt.pop %v1090
    %v1353 = vmul.f32 %v1090, %v1352
    %vm1354 = vcmp.eq.f32.partialorder %v1090, inf
    %v1355 = vsel %vm1354, %v1090, %v1353
    %vm1356 = vcmp.eq.f32.partialorder %v1090, 0.0
    %v1357 = vand.u32 %v1090, 2147483648
    %v1358 = vsel %vm1356, %v1357, %v1355
    %v1359 = vrsqrt.pop %v1091
    %v1360 = vmul.f32 %v1091, %v1359
    %vm1361 = vcmp.eq.f32.partialorder %v1091, inf
    %v1362 = vsel %vm1361, %v1091, %v1360
    %vm1363 = vcmp.eq.f32.partialorder %v1091, 0.0
    %v1364 = vand.u32 %v1091, 2147483648
    %v1365 = vsel %vm1363, %v1364, %v1362
    %v1366 = vrsqrt.pop %v1092
    %v1367 = vmul.f32 %v1092, %v1366
    %vm1368 = vcmp.eq.f32.partialorder %v1092, inf
    %v1369 = vsel %vm1368, %v1092, %v1367
    %vm1370 = vcmp.eq.f32.partialorder %v1092, 0.0
    %v1371 = vand.u32 %v1092, 2147483648
    %v1372 = vsel %vm1370, %v1371, %v1369
    %v1373 = vrsqrt.pop %v1093
    %v1374 = vmul.f32 %v1093, %v1373
    %vm1375 = vcmp.eq.f32.partialorder %v1093, inf
    %v1376 = vsel %vm1375, %v1093, %v1374
    %vm1377 = vcmp.eq.f32.partialorder %v1093, 0.0
    %v1378 = vand.u32 %v1093, 2147483648
    %v1379 = vsel %vm1377, %v1378, %v1376
    %v1380 = vrsqrt.pop %v1094
    %v1381 = vmul.f32 %v1094, %v1380
    %vm1382 = vcmp.eq.f32.partialorder %v1094, inf
    %v1383 = vsel %vm1382, %v1094, %v1381
    %vm1384 = vcmp.eq.f32.partialorder %v1094, 0.0
    %v1385 = vand.u32 %v1094, 2147483648
    %v1386 = vsel %vm1384, %v1385, %v1383
    %v1387 = vrsqrt.pop %v1095
    %v1388 = vmul.f32 %v1095, %v1387
    %vm1389 = vcmp.eq.f32.partialorder %v1095, inf
    %v1390 = vsel %vm1389, %v1095, %v1388
    %vm1391 = vcmp.eq.f32.partialorder %v1095, 0.0
    %v1392 = vand.u32 %v1095, 2147483648
    %v1393 = vsel %vm1391, %v1392, %v1390
    %v1394 = vrsqrt.pop %v1096
    %v1395 = vmul.f32 %v1096, %v1394
    %vm1396 = vcmp.eq.f32.partialorder %v1096, inf
    %v1397 = vsel %vm1396, %v1096, %v1395
    %vm1398 = vcmp.eq.f32.partialorder %v1096, 0.0
    %v1399 = vand.u32 %v1096, 2147483648
    %v1400 = vsel %vm1398, %v1399, %v1397
    %v1401 = vrsqrt.pop %v1097
    %v1402 = vmul.f32 %v1097, %v1401
    %vm1403 = vcmp.eq.f32.partialorder %v1097, inf
    %v1404 = vsel %vm1403, %v1097, %v1402
    %vm1405 = vcmp.eq.f32.partialorder %v1097, 0.0
    %v1406 = vand.u32 %v1097, 2147483648
    %v1407 = vsel %vm1405, %v1406, %v1404
    %v1408 = vrsqrt.pop %v1098
    %v1409 = vmul.f32 %v1098, %v1408
    %vm1410 = vcmp.eq.f32.partialorder %v1098, inf
    %v1411 = vsel %vm1410, %v1098, %v1409
    %vm1412 = vcmp.eq.f32.partialorder %v1098, 0.0
    %v1413 = vand.u32 %v1098, 2147483648
    %v1414 = vsel %vm1412, %v1413, %v1411
    %v1415 = vrsqrt.pop %v1099
    %v1416 = vmul.f32 %v1099, %v1415
    %vm1417 = vcmp.eq.f32.partialorder %v1099, inf
    %v1418 = vsel %vm1417, %v1099, %v1416
    %vm1419 = vcmp.eq.f32.partialorder %v1099, 0.0
    %v1420 = vand.u32 %v1099, 2147483648
    %v1421 = vsel %vm1419, %v1420, %v1418
    %v1422 = vrsqrt.pop %v1100
    %v1423 = vmul.f32 %v1100, %v1422
    %vm1424 = vcmp.eq.f32.partialorder %v1100, inf
    %v1425 = vsel %vm1424, %v1100, %v1423
    %vm1426 = vcmp.eq.f32.partialorder %v1100, 0.0
    %v1427 = vand.u32 %v1100, 2147483648
    %v1428 = vsel %vm1426, %v1427, %v1425
    %v1429 = vrsqrt.pop %v1101
    %v1430 = vmul.f32 %v1101, %v1429
    %vm1431 = vcmp.eq.f32.partialorder %v1101, inf
    %v1432 = vsel %vm1431, %v1101, %v1430
    %vm1433 = vcmp.eq.f32.partialorder %v1101, 0.0
    %v1434 = vand.u32 %v1101, 2147483648
    %v1435 = vsel %vm1433, %v1434, %v1432
    %v1436 = vrsqrt.pop %v1102
    %v1437 = vmul.f32 %v1102, %v1436
    %vm1438 = vcmp.eq.f32.partialorder %v1102, inf
    %v1439 = vsel %vm1438, %v1102, %v1437
    %vm1440 = vcmp.eq.f32.partialorder %v1102, 0.0
    %v1441 = vand.u32 %v1102, 2147483648
    %v1442 = vsel %vm1440, %v1441, %v1439
    %v1443 = vrsqrt.pop %v1103
    %v1444 = vmul.f32 %v1103, %v1443
    %vm1445 = vcmp.eq.f32.partialorder %v1103, inf
    %v1446 = vsel %vm1445, %v1103, %v1444
    %vm1447 = vcmp.eq.f32.partialorder %v1103, 0.0
    %v1448 = vand.u32 %v1103, 2147483648
    %v1449 = vsel %vm1447, %v1448, %v1446
    %v1450 = vrsqrt.pop %v1104
    %v1451 = vmul.f32 %v1104, %v1450
    %vm1452 = vcmp.eq.f32.partialorder %v1104, inf
    %v1453 = vsel %vm1452, %v1104, %v1451
    %vm1454 = vcmp.eq.f32.partialorder %v1104, 0.0
    %v1455 = vand.u32 %v1104, 2147483648
    %v1456 = vsel %vm1454, %v1455, %v1453
    %v1457 = vrsqrt.pop %v1105
    %v1458 = vmul.f32 %v1105, %v1457
    %vm1459 = vcmp.eq.f32.partialorder %v1105, inf
    %v1460 = vsel %vm1459, %v1105, %v1458
    %vm1461 = vcmp.eq.f32.partialorder %v1105, 0.0
    %v1462 = vand.u32 %v1105, 2147483648
    %v1463 = vsel %vm1461, %v1462, %v1460
    %v1464 = vrsqrt.pop %v1106
    %v1465 = vmul.f32 %v1106, %v1464
    %vm1466 = vcmp.eq.f32.partialorder %v1106, inf
    %v1467 = vsel %vm1466, %v1106, %v1465
    %vm1468 = vcmp.eq.f32.partialorder %v1106, 0.0
    %v1469 = vand.u32 %v1106, 2147483648
    %v1470 = vsel %vm1468, %v1469, %v1467
    %v1471 = vrsqrt.pop %v1107
    %v1472 = vmul.f32 %v1107, %v1471
    %vm1473 = vcmp.eq.f32.partialorder %v1107, inf
    %v1474 = vsel %vm1473, %v1107, %v1472
    %vm1475 = vcmp.eq.f32.partialorder %v1107, 0.0
    %v1476 = vand.u32 %v1107, 2147483648
    %v1477 = vsel %vm1475, %v1476, %v1474
    %v1478 = vrsqrt.pop %v1108
    %v1479 = vmul.f32 %v1108, %v1478
    %vm1480 = vcmp.eq.f32.partialorder %v1108, inf
    %v1481 = vsel %vm1480, %v1108, %v1479
    %vm1482 = vcmp.eq.f32.partialorder %v1108, 0.0
    %v1483 = vand.u32 %v1108, 2147483648
    %v1484 = vsel %vm1482, %v1483, %v1481
    %v1485 = vrsqrt.pop %v1109
    %v1486 = vmul.f32 %v1109, %v1485
    %vm1487 = vcmp.eq.f32.partialorder %v1109, inf
    %v1488 = vsel %vm1487, %v1109, %v1486
    %vm1489 = vcmp.eq.f32.partialorder %v1109, 0.0
    %v1490 = vand.u32 %v1109, 2147483648
    %v1491 = vsel %vm1489, %v1490, %v1488
    %v1492 = vrsqrt.pop %v1110
    %v1493 = vmul.f32 %v1110, %v1492
    %vm1494 = vcmp.eq.f32.partialorder %v1110, inf
    %v1495 = vsel %vm1494, %v1110, %v1493
    %vm1496 = vcmp.eq.f32.partialorder %v1110, 0.0
    %v1497 = vand.u32 %v1110, 2147483648
    %v1498 = vsel %vm1496, %v1497, %v1495
    %v1499 = vrsqrt.pop %v1111
    %v1500 = vmul.f32 %v1111, %v1499
    %vm1501 = vcmp.eq.f32.partialorder %v1111, inf
    %v1502 = vsel %vm1501, %v1111, %v1500
    %vm1503 = vcmp.eq.f32.partialorder %v1111, 0.0
    %v1504 = vand.u32 %v1111, 2147483648
    %v1505 = vsel %vm1503, %v1504, %v1502
    %v1506 = vrsqrt.pop %v1112
    %v1507 = vmul.f32 %v1112, %v1506
    %vm1508 = vcmp.eq.f32.partialorder %v1112, inf
    %v1509 = vsel %vm1508, %v1112, %v1507
    %vm1510 = vcmp.eq.f32.partialorder %v1112, 0.0
    %v1511 = vand.u32 %v1112, 2147483648
    %v1512 = vsel %vm1510, %v1511, %v1509
    %v1513 = vrsqrt.pop %v1113
    %v1514 = vmul.f32 %v1113, %v1513
    %vm1515 = vcmp.eq.f32.partialorder %v1113, inf
    %v1516 = vsel %vm1515, %v1113, %v1514
    %vm1517 = vcmp.eq.f32.partialorder %v1113, 0.0
    %v1518 = vand.u32 %v1113, 2147483648
    %v1519 = vsel %vm1517, %v1518, %v1516
    %v1520 = vrsqrt.pop %v1114
    %v1521 = vmul.f32 %v1114, %v1520
    %vm1522 = vcmp.eq.f32.partialorder %v1114, inf
    %v1523 = vsel %vm1522, %v1114, %v1521
    %vm1524 = vcmp.eq.f32.partialorder %v1114, 0.0
    %v1525 = vand.u32 %v1114, 2147483648
    %v1526 = vsel %vm1524, %v1525, %v1523
    %v1527 = vrsqrt.pop %v1115
    %v1528 = vmul.f32 %v1115, %v1527
    %vm1529 = vcmp.eq.f32.partialorder %v1115, inf
    %v1530 = vsel %vm1529, %v1115, %v1528
    %vm1531 = vcmp.eq.f32.partialorder %v1115, 0.0
    %v1532 = vand.u32 %v1115, 2147483648
    %v1533 = vsel %vm1531, %v1532, %v1530
    %v1534 = vrsqrt.pop %v1116
    %v1535 = vmul.f32 %v1116, %v1534
    %vm1536 = vcmp.eq.f32.partialorder %v1116, inf
    %v1537 = vsel %vm1536, %v1116, %v1535
    %vm1538 = vcmp.eq.f32.partialorder %v1116, 0.0
    %v1539 = vand.u32 %v1116, 2147483648
    %v1540 = vsel %vm1538, %v1539, %v1537
    %v1541 = vrsqrt.pop %v1117
    %v1542 = vmul.f32 %v1117, %v1541
    %vm1543 = vcmp.eq.f32.partialorder %v1117, inf
    %v1544 = vsel %vm1543, %v1117, %v1542
    %vm1545 = vcmp.eq.f32.partialorder %v1117, 0.0
    %v1546 = vand.u32 %v1117, 2147483648
    %v1547 = vsel %vm1545, %v1546, %v1544
    %v1548 = vrsqrt.pop %v1118
    %v1549 = vmul.f32 %v1118, %v1548
    %vm1550 = vcmp.eq.f32.partialorder %v1118, inf
    %v1551 = vsel %vm1550, %v1118, %v1549
    %vm1552 = vcmp.eq.f32.partialorder %v1118, 0.0
    %v1553 = vand.u32 %v1118, 2147483648
    %v1554 = vsel %vm1552, %v1553, %v1551
    %v1555 = vrsqrt.pop %v1119
    %v1556 = vmul.f32 %v1119, %v1555
    %vm1557 = vcmp.eq.f32.partialorder %v1119, inf
    %v1558 = vsel %vm1557, %v1119, %v1556
    %vm1559 = vcmp.eq.f32.partialorder %v1119, 0.0
    %v1560 = vand.u32 %v1119, 2147483648
    %v1561 = vsel %vm1559, %v1560, %v1558
    %v1562 = vrsqrt.pop %v1120
    %v1563 = vmul.f32 %v1120, %v1562
    %vm1564 = vcmp.eq.f32.partialorder %v1120, inf
    %v1565 = vsel %vm1564, %v1120, %v1563
    %vm1566 = vcmp.eq.f32.partialorder %v1120, 0.0
    %v1567 = vand.u32 %v1120, 2147483648
    %v1568 = vsel %vm1566, %v1567, %v1565
    %v1569 = vadd.f32 %v1127, 1e-08
    %v1570 = vadd.f32 %v1134, 1e-08
    %v1571 = vadd.f32 %v1141, 1e-08
    %v1572 = vadd.f32 %v1148, 1e-08
    %v1573 = vadd.f32 %v1155, 1e-08
    %v1574 = vadd.f32 %v1162, 1e-08
    %v1575 = vadd.f32 %v1169, 1e-08
    %v1576 = vadd.f32 %v1176, 1e-08
    %v1577 = vadd.f32 %v1183, 1e-08
    %v1578 = vadd.f32 %v1190, 1e-08
    %v1579 = vadd.f32 %v1197, 1e-08
    %v1580 = vadd.f32 %v1204, 1e-08
    %v1581 = vadd.f32 %v1211, 1e-08
    %v1582 = vadd.f32 %v1218, 1e-08
    %v1583 = vadd.f32 %v1225, 1e-08
    %v1584 = vadd.f32 %v1232, 1e-08
    %v1585 = vadd.f32 %v1239, 1e-08
    %v1586 = vadd.f32 %v1246, 1e-08
    %v1587 = vadd.f32 %v1253, 1e-08
    %v1588 = vadd.f32 %v1260, 1e-08
    %v1589 = vadd.f32 %v1267, 1e-08
    %v1590 = vadd.f32 %v1274, 1e-08
    %v1591 = vadd.f32 %v1281, 1e-08
    %v1592 = vadd.f32 %v1288, 1e-08
    %v1593 = vadd.f32 %v1295, 1e-08
    %v1594 = vadd.f32 %v1302, 1e-08
    %v1595 = vadd.f32 %v1309, 1e-08
    %v1596 = vadd.f32 %v1316, 1e-08
    %v1597 = vadd.f32 %v1323, 1e-08
    %v1598 = vadd.f32 %v1330, 1e-08
    %v1599 = vadd.f32 %v1337, 1e-08
    %v1600 = vadd.f32 %v1344, 1e-08
    %v1601 = vadd.f32 %v1351, 1e-08
    %v1602 = vadd.f32 %v1358, 1e-08
    %v1603 = vadd.f32 %v1365, 1e-08
    %v1604 = vadd.f32 %v1372, 1e-08
    %v1605 = vadd.f32 %v1379, 1e-08
    %v1606 = vadd.f32 %v1386, 1e-08
    %v1607 = vadd.f32 %v1393, 1e-08
    %v1608 = vadd.f32 %v1400, 1e-08
    %v1609 = vadd.f32 %v1407, 1e-08
    %v1610 = vadd.f32 %v1414, 1e-08
    %v1611 = vadd.f32 %v1421, 1e-08
    %v1612 = vadd.f32 %v1428, 1e-08
    %v1613 = vadd.f32 %v1435, 1e-08
    %v1614 = vadd.f32 %v1442, 1e-08
    %v1615 = vadd.f32 %v1449, 1e-08
    %v1616 = vadd.f32 %v1456, 1e-08
    %v1617 = vadd.f32 %v1463, 1e-08
    %v1618 = vadd.f32 %v1470, 1e-08
    %v1619 = vadd.f32 %v1477, 1e-08
    %v1620 = vadd.f32 %v1484, 1e-08
    %v1621 = vadd.f32 %v1491, 1e-08
    %v1622 = vadd.f32 %v1498, 1e-08
    %v1623 = vadd.f32 %v1505, 1e-08
    %v1624 = vadd.f32 %v1512, 1e-08
    %v1625 = vadd.f32 %v1519, 1e-08
    %v1626 = vadd.f32 %v1526, 1e-08
    %v1627 = vadd.f32 %v1533, 1e-08
    %v1628 = vadd.f32 %v1540, 1e-08
    %v1629 = vadd.f32 %v1547, 1e-08
    %v1630 = vadd.f32 %v1554, 1e-08
    %v1631 = vadd.f32 %v1561, 1e-08
    %v1632 = vadd.f32 %v1568, 1e-08
    %v1633 = vrcp.pop %v1569
    %v1634 = vrcp.pop %v1570
    %v1635 = vrcp.pop %v1571
    %v1636 = vrcp.pop %v1572
    %v1637 = vrcp.pop %v1573
    %v1638 = vrcp.pop %v1574
    %v1639 = vrcp.pop %v1575
    %v1640 = vrcp.pop %v1576
    %v1641 = vrcp.pop %v1577
    %v1642 = vrcp.pop %v1578
    %v1643 = vrcp.pop %v1579
    %v1644 = vrcp.pop %v1580
    %v1645 = vrcp.pop %v1581
    %v1646 = vrcp.pop %v1582
    %v1647 = vrcp.pop %v1583
    %v1648 = vrcp.pop %v1584
    %v1649 = vrcp.pop %v1585
    %v1650 = vrcp.pop %v1586
    %v1651 = vrcp.pop %v1587
    %v1652 = vrcp.pop %v1588
    %v1653 = vrcp.pop %v1589
    %v1654 = vrcp.pop %v1590
    %v1655 = vrcp.pop %v1591
    %v1656 = vrcp.pop %v1592
    %v1657 = vrcp.pop %v1593
    %v1658 = vrcp.pop %v1594
    %v1659 = vrcp.pop %v1595
    %v1660 = vrcp.pop %v1596
    %v1661 = vrcp.pop %v1597
    %v1662 = vrcp.pop %v1598
    %v1663 = vrcp.pop %v1599
    %v1664 = vrcp.pop %v1600
    %v1665 = vrcp.pop %v1601
    %v1666 = vrcp.pop %v1602
    %v1667 = vrcp.pop %v1603
    %v1668 = vrcp.pop %v1604
    %v1669 = vrcp.pop %v1605
    %v1670 = vrcp.pop %v1606
    %v1671 = vrcp.pop %v1607
    %v1672 = vrcp.pop %v1608
    %v1673 = vrcp.pop %v1609
    %v1674 = vrcp.pop %v1610
    %v1675 = vrcp.pop %v1611
    %v1676 = vrcp.pop %v1612
    %v1677 = vrcp.pop %v1613
    %v1678 = vrcp.pop %v1614
    %v1679 = vrcp.pop %v1615
    %v1680 = vrcp.pop %v1616
    %v1681 = vrcp.pop %v1617
    %v1682 = vrcp.pop %v1618
    %v1683 = vrcp.pop %v1619
    %v1684 = vrcp.pop %v1620
    %v1685 = vrcp.pop %v1621
    %v1686 = vrcp.pop %v1622
    %v1687 = vrcp.pop %v1623
    %v1688 = vrcp.pop %v1624
    %v1689 = vrcp.pop %v1625
    %v1690 = vrcp.pop %v1626
    %v1691 = vrcp.pop %v1627
    %v1692 = vrcp.pop %v1628
    %v1693 = vrcp.pop %v1629
    %v1694 = vrcp.pop %v1630
    %v1695 = vrcp.pop %v1631
    %v1696 = vrcp.pop %v1632
    %v1697 = vmul.f32 %v801, %v1633
    %v1698 = vmul.f32 %v802, %v1634
    %v1699 = vmul.f32 %v803, %v1635
    %v1700 = vmul.f32 %v804, %v1636
    %v1701 = vmul.f32 %v805, %v1637
    %v1702 = vmul.f32 %v806, %v1638
    %v1703 = vmul.f32 %v807, %v1639
    %v1704 = vmul.f32 %v808, %v1640
    %v1705 = vmul.f32 %v809, %v1641
    %v1706 = vmul.f32 %v810, %v1642
    %v1707 = vmul.f32 %v811, %v1643
    %v1708 = vmul.f32 %v812, %v1644
    %v1709 = vmul.f32 %v813, %v1645
    %v1710 = vmul.f32 %v814, %v1646
    %v1711 = vmul.f32 %v815, %v1647
    %v1712 = vmul.f32 %v816, %v1648
    %v1713 = vmul.f32 %v817, %v1649
    %v1714 = vmul.f32 %v818, %v1650
    %v1715 = vmul.f32 %v819, %v1651
    %v1716 = vmul.f32 %v820, %v1652
    %v1717 = vmul.f32 %v821, %v1653
    %v1718 = vmul.f32 %v822, %v1654
    %v1719 = vmul.f32 %v823, %v1655
    %v1720 = vmul.f32 %v824, %v1656
    %v1721 = vmul.f32 %v825, %v1657
    %v1722 = vmul.f32 %v826, %v1658
    %v1723 = vmul.f32 %v827, %v1659
    %v1724 = vmul.f32 %v828, %v1660
    %v1725 = vmul.f32 %v829, %v1661
    %v1726 = vmul.f32 %v830, %v1662
    %v1727 = vmul.f32 %v831, %v1663
    %v1728 = vmul.f32 %v832, %v1664
    %v1729 = vmul.f32 %v833, %v1665
    %v1730 = vmul.f32 %v834, %v1666
    %v1731 = vmul.f32 %v835, %v1667
    %v1732 = vmul.f32 %v836, %v1668
    %v1733 = vmul.f32 %v837, %v1669
    %v1734 = vmul.f32 %v838, %v1670
    %v1735 = vmul.f32 %v839, %v1671
    %v1736 = vmul.f32 %v840, %v1672
    %v1737 = vmul.f32 %v841, %v1673
    %v1738 = vmul.f32 %v842, %v1674
    %v1739 = vmul.f32 %v843, %v1675
    %v1740 = vmul.f32 %v844, %v1676
    %v1741 = vmul.f32 %v845, %v1677
    %v1742 = vmul.f32 %v846, %v1678
    %v1743 = vmul.f32 %v847, %v1679
    %v1744 = vmul.f32 %v848, %v1680
    %v1745 = vmul.f32 %v849, %v1681
    %v1746 = vmul.f32 %v850, %v1682
    %v1747 = vmul.f32 %v851, %v1683
    %v1748 = vmul.f32 %v852, %v1684
    %v1749 = vmul.f32 %v853, %v1685
    %v1750 = vmul.f32 %v854, %v1686
    %v1751 = vmul.f32 %v855, %v1687
    %v1752 = vmul.f32 %v856, %v1688
    %v1753 = vmul.f32 %v857, %v1689
    %v1754 = vmul.f32 %v858, %v1690
    %v1755 = vmul.f32 %v859, %v1691
    %v1756 = vmul.f32 %v860, %v1692
    %v1757 = vmul.f32 %v861, %v1693
    %v1758 = vmul.f32 %v862, %v1694
    %v1759 = vmul.f32 %v863, %v1695
    %v1760 = vmul.f32 %v864, %v1696
    %v1761 = vlaneseq
    %v1762 = vshrl.u32 %v1761, 7
    %v1763 = vsub.s32 0, %v1762
    %v1764 = vrot.slane %v90, %v1763
    %v1765 = vmul.f32 %v1697, %v1764
    %v1766 = vmul.f32 %v1698, %v1764
    %v1767 = vmul.f32 %v1699, %v1764
    %v1768 = vmul.f32 %v1700, %v1764
    %v1769 = vmul.f32 %v1701, %v1764
    %v1770 = vmul.f32 %v1702, %v1764
    %v1771 = vmul.f32 %v1703, %v1764
    %v1772 = vmul.f32 %v1704, %v1764
    %v1773 = vmul.f32 %v1705, %v1764
    %v1774 = vmul.f32 %v1706, %v1764
    %v1775 = vmul.f32 %v1707, %v1764
    %v1776 = vmul.f32 %v1708, %v1764
    %v1777 = vmul.f32 %v1709, %v1764
    %v1778 = vmul.f32 %v1710, %v1764
    %v1779 = vmul.f32 %v1711, %v1764
    %v1780 = vmul.f32 %v1712, %v1764
    %v1781 = vmul.f32 %v1713, %v1764
    %v1782 = vmul.f32 %v1714, %v1764
    %v1783 = vmul.f32 %v1715, %v1764
    %v1784 = vmul.f32 %v1716, %v1764
    %v1785 = vmul.f32 %v1717, %v1764
    %v1786 = vmul.f32 %v1718, %v1764
    %v1787 = vmul.f32 %v1719, %v1764
    %v1788 = vmul.f32 %v1720, %v1764
    %v1789 = vmul.f32 %v1721, %v1764
    %v1790 = vmul.f32 %v1722, %v1764
    %v1791 = vmul.f32 %v1723, %v1764
    %v1792 = vmul.f32 %v1724, %v1764
    %v1793 = vmul.f32 %v1725, %v1764
    %v1794 = vmul.f32 %v1726, %v1764
    %v1795 = vmul.f32 %v1727, %v1764
    %v1796 = vmul.f32 %v1728, %v1764
    %v1797 = vmul.f32 %v1729, %v1764
    %v1798 = vmul.f32 %v1730, %v1764
    %v1799 = vmul.f32 %v1731, %v1764
    %v1800 = vmul.f32 %v1732, %v1764
    %v1801 = vmul.f32 %v1733, %v1764
    %v1802 = vmul.f32 %v1734, %v1764
    %v1803 = vmul.f32 %v1735, %v1764
    %v1804 = vmul.f32 %v1736, %v1764
    %v1805 = vmul.f32 %v1737, %v1764
    %v1806 = vmul.f32 %v1738, %v1764
    %v1807 = vmul.f32 %v1739, %v1764
    %v1808 = vmul.f32 %v1740, %v1764
    %v1809 = vmul.f32 %v1741, %v1764
    %v1810 = vmul.f32 %v1742, %v1764
    %v1811 = vmul.f32 %v1743, %v1764
    %v1812 = vmul.f32 %v1744, %v1764
    %v1813 = vmul.f32 %v1745, %v1764
    %v1814 = vmul.f32 %v1746, %v1764
    %v1815 = vmul.f32 %v1747, %v1764
    %v1816 = vmul.f32 %v1748, %v1764
    %v1817 = vmul.f32 %v1749, %v1764
    %v1818 = vmul.f32 %v1750, %v1764
    %v1819 = vmul.f32 %v1751, %v1764
    %v1820 = vmul.f32 %v1752, %v1764
    %v1821 = vmul.f32 %v1753, %v1764
    %v1822 = vmul.f32 %v1754, %v1764
    %v1823 = vmul.f32 %v1755, %v1764
    %v1824 = vmul.f32 %v1756, %v1764
    %v1825 = vmul.f32 %v1757, %v1764
    %v1826 = vmul.f32 %v1758, %v1764
    %v1827 = vmul.f32 %v1759, %v1764
    %v1828 = vmul.f32 %v1760, %v1764
    %v1829 = vlaneseq
    %v1830 = vshrl.u32 %v1829, 7
    %v1831 = vsub.s32 0, %v1830
    %v1832 = vrot.slane %v91, %v1831
    %v1833 = vadd.f32 %v1765, %v1832
    %v1834 = vadd.f32 %v1766, %v1832
    %v1835 = vadd.f32 %v1767, %v1832
    %v1836 = vadd.f32 %v1768, %v1832
    %v1837 = vadd.f32 %v1769, %v1832
    %v1838 = vadd.f32 %v1770, %v1832
    %v1839 = vadd.f32 %v1771, %v1832
    %v1840 = vadd.f32 %v1772, %v1832
    %v1841 = vadd.f32 %v1773, %v1832
    %v1842 = vadd.f32 %v1774, %v1832
    %v1843 = vadd.f32 %v1775, %v1832
    %v1844 = vadd.f32 %v1776, %v1832
    %v1845 = vadd.f32 %v1777, %v1832
    %v1846 = vadd.f32 %v1778, %v1832
    %v1847 = vadd.f32 %v1779, %v1832
    %v1848 = vadd.f32 %v1780, %v1832
    %v1849 = vadd.f32 %v1781, %v1832
    %v1850 = vadd.f32 %v1782, %v1832
    %v1851 = vadd.f32 %v1783, %v1832
    %v1852 = vadd.f32 %v1784, %v1832
    %v1853 = vadd.f32 %v1785, %v1832
    %v1854 = vadd.f32 %v1786, %v1832
    %v1855 = vadd.f32 %v1787, %v1832
    %v1856 = vadd.f32 %v1788, %v1832
    %v1857 = vadd.f32 %v1789, %v1832
    %v1858 = vadd.f32 %v1790, %v1832
    %v1859 = vadd.f32 %v1791, %v1832
    %v1860 = vadd.f32 %v1792, %v1832
    %v1861 = vadd.f32 %v1793, %v1832
    %v1862 = vadd.f32 %v1794, %v1832
    %v1863 = vadd.f32 %v1795, %v1832
    %v1864 = vadd.f32 %v1796, %v1832
    %v1865 = vadd.f32 %v1797, %v1832
    %v1866 = vadd.f32 %v1798, %v1832
    %v1867 = vadd.f32 %v1799, %v1832
    %v1868 = vadd.f32 %v1800, %v1832
    %v1869 = vadd.f32 %v1801, %v1832
    %v1870 = vadd.f32 %v1802, %v1832
    %v1871 = vadd.f32 %v1803, %v1832
    %v1872 = vadd.f32 %v1804, %v1832
    %v1873 = vadd.f32 %v1805, %v1832
    %v1874 = vadd.f32 %v1806, %v1832
    %v1875 = vadd.f32 %v1807, %v1832
    %v1876 = vadd.f32 %v1808, %v1832
    %v1877 = vadd.f32 %v1809, %v1832
    %v1878 = vadd.f32 %v1810, %v1832
    %v1879 = vadd.f32 %v1811, %v1832
    %v1880 = vadd.f32 %v1812, %v1832
    %v1881 = vadd.f32 %v1813, %v1832
    %v1882 = vadd.f32 %v1814, %v1832
    %v1883 = vadd.f32 %v1815, %v1832
    %v1884 = vadd.f32 %v1816, %v1832
    %v1885 = vadd.f32 %v1817, %v1832
    %v1886 = vadd.f32 %v1818, %v1832
    %v1887 = vadd.f32 %v1819, %v1832
    %v1888 = vadd.f32 %v1820, %v1832
    %v1889 = vadd.f32 %v1821, %v1832
    %v1890 = vadd.f32 %v1822, %v1832
    %v1891 = vadd.f32 %v1823, %v1832
    %v1892 = vadd.f32 %v1824, %v1832
    %v1893 = vadd.f32 %v1825, %v1832
    %v1894 = vadd.f32 %v1826, %v1832
    %v1895 = vadd.f32 %v1827, %v1832
    %v1896 = vadd.f32 %v1828, %v1832
    %1897 = vst [vmem:[#allocation5] sm:$0xff] %v1833
    %1898 = vst [vmem:[#allocation5 + $0x8] sm:$0xff] %v1834
    %1899 = vst [vmem:[#allocation5 + $0x10] sm:$0xff] %v1835
    %1900 = vst [vmem:[#allocation5 + $0x18] sm:$0xff] %v1836
    %1901 = vst [vmem:[#allocation5 + $0x20] sm:$0xff] %v1837
    %1902 = vst [vmem:[#allocation5 + $0x28] sm:$0xff] %v1838
    %1903 = vst [vmem:[#allocation5 + $0x30] sm:$0xff] %v1839
    %1904 = vst [vmem:[#allocation5 + $0x38] sm:$0xff] %v1840
    %1905 = vst [vmem:[#allocation5 + $0x40] sm:$0xff] %v1841
    %1906 = vst [vmem:[#allocation5 + $0x48] sm:$0xff] %v1842
    %1907 = vst [vmem:[#allocation5 + $0x50] sm:$0xff] %v1843
    %1908 = vst [vmem:[#allocation5 + $0x58] sm:$0xff] %v1844
    %1909 = vst [vmem:[#allocation5 + $0x60] sm:$0xff] %v1845
    %1910 = vst [vmem:[#allocation5 + $0x68] sm:$0xff] %v1846
    %1911 = vst [vmem:[#allocation5 + $0x70] sm:$0xff] %v1847
    %1912 = vst [vmem:[#allocation5 + $0x78] sm:$0xff] %v1848
    %1913 = vst [vmem:[#allocation5 + $0x80] sm:$0xff] %v1849
    %1914 = vst [vmem:[#allocation5 + $0x88] sm:$0xff] %v1850
    %1915 = vst [vmem:[#allocation5 + $0x90] sm:$0xff] %v1851
    %1916 = vst [vmem:[#allocation5 + $0x98] sm:$0xff] %v1852
    %1917 = vst [vmem:[#allocation5 + $0xa0] sm:$0xff] %v1853
    %1918 = vst [vmem:[#allocation5 + $0xa8] sm:$0xff] %v1854
    %1919 = vst [vmem:[#allocation5 + $0xb0] sm:$0xff] %v1855
    %1920 = vst [vmem:[#allocation5 + $0xb8] sm:$0xff] %v1856
    %1921 = vst [vmem:[#allocation5 + $0xc0] sm:$0xff] %v1857
    %1922 = vst [vmem:[#allocation5 + $0xc8] sm:$0xff] %v1858
    %1923 = vst [vmem:[#allocation5 + $0xd0] sm:$0xff] %v1859
    %1924 = vst [vmem:[#allocation5 + $0xd8] sm:$0xff] %v1860
    %1925 = vst [vmem:[#allocation5 + $0xe0] sm:$0xff] %v1861
    %1926 = vst [vmem:[#allocation5 + $0xe8] sm:$0xff] %v1862
    %1927 = vst [vmem:[#allocation5 + $0xf0] sm:$0xff] %v1863
    %1928 = vst [vmem:[#allocation5 + $0xf8] sm:$0xff] %v1864
    %1929 = vst [vmem:[#allocation5 + $0x100] sm:$0xff] %v1865
    %1930 = vst [vmem:[#allocation5 + $0x108] sm:$0xff] %v1866
    %1931 = vst [vmem:[#allocation5 + $0x110] sm:$0xff] %v1867
    %1932 = vst [vmem:[#allocation5 + $0x118] sm:$0xff] %v1868
    %1933 = vst [vmem:[#allocation5 + $0x120] sm:$0xff] %v1869
    %1934 = vst [vmem:[#allocation5 + $0x128] sm:$0xff] %v1870
    %1935 = vst [vmem:[#allocation5 + $0x130] sm:$0xff] %v1871
    %1936 = vst [vmem:[#allocation5 + $0x138] sm:$0xff] %v1872
    %1937 = vst [vmem:[#allocation5 + $0x140] sm:$0xff] %v1873
    %1938 = vst [vmem:[#allocation5 + $0x148] sm:$0xff] %v1874
    %1939 = vst [vmem:[#allocation5 + $0x150] sm:$0xff] %v1875
    %1940 = vst [vmem:[#allocation5 + $0x158] sm:$0xff] %v1876
    %1941 = vst [vmem:[#allocation5 + $0x160] sm:$0xff] %v1877
    %1942 = vst [vmem:[#allocation5 + $0x168] sm:$0xff] %v1878
    %1943 = vst [vmem:[#allocation5 + $0x170] sm:$0xff] %v1879
    %1944 = vst [vmem:[#allocation5 + $0x178] sm:$0xff] %v1880
    %1945 = vst [vmem:[#allocation5 + $0x180] sm:$0xff] %v1881
    %1946 = vst [vmem:[#allocation5 + $0x188] sm:$0xff] %v1882
    %1947 = vst [vmem:[#allocation5 + $0x190] sm:$0xff] %v1883
    %1948 = vst [vmem:[#allocation5 + $0x198] sm:$0xff] %v1884
    %1949 = vst [vmem:[#allocation5 + $0x1a0] sm:$0xff] %v1885
    %1950 = vst [vmem:[#allocation5 + $0x1a8] sm:$0xff] %v1886
    %1951 = vst [vmem:[#allocation5 + $0x1b0] sm:$0xff] %v1887
    %1952 = vst [vmem:[#allocation5 + $0x1b8] sm:$0xff] %v1888
    %1953 = vst [vmem:[#allocation5 + $0x1c0] sm:$0xff] %v1889
    %1954 = vst [vmem:[#allocation5 + $0x1c8] sm:$0xff] %v1890
    %1955 = vst [vmem:[#allocation5 + $0x1d0] sm:$0xff] %v1891
    %1956 = vst [vmem:[#allocation5 + $0x1d8] sm:$0xff] %v1892
    %1957 = vst [vmem:[#allocation5 + $0x1e0] sm:$0xff] %v1893
    %1958 = vst [vmem:[#allocation5 + $0x1e8] sm:$0xff] %v1894
    %1959 = vst [vmem:[#allocation5 + $0x1f0] sm:$0xff] %v1895
    %1960 = vst [vmem:[#allocation5 + $0x1f8] sm:$0xff] %v1896
    // Predicated region
    $region14: #{tpu_custom_call.1} parent=1 // pred_check
      _
    $region15: #{tpu_custom_call.1} parent=1 // pred_check_branch
      %1962 = sbr.rel (0) target = $region17
    $region16: #{tpu_custom_call.1} parent=1 // pred_region
      %s1964 = ssub.s32 8192, 8192
      %1965 = vsyncadd [#allocation4], %s1964
      %s1966 = sshll.u32 [#allocation5], 4
      %s1967 = int_to_ptr.vmem [resolvable:$true] %s1966
      %1972 = dma.vmem_to_hbm [thread:$0]  %s1967, 8192, %s2, [#allocation4], 128, 128, 8
    $region17: #{tpu_custom_call.1} parent=1 // pred_fallthru
      _
    // Predicated region
    $region18: #{tpu_custom_call.1} parent=1 // pred_check
      _
    $region19: #{tpu_custom_call.1} parent=1 // pred_check_branch
      %1974 = sbr.rel (0) target = $region21
    $region20: #{tpu_custom_call.1} parent=1 // pred_region
      %1975 = dma.done [#allocation4], 8192
    $region21: #{tpu_custom_call.1} parent=1 // pred_fallthru
      _
    %1976 = vsyncpa [#allocation3], 1
    %1977 = vsyncpa [#allocation4], 1

</llo_original>
